<compile_context>
chip_gen: v5e
topology: v5e:2x2
jax: 0.10.0
libtpu: 0.0.40
codegen_flags: <defaults>
</compile_context>

<pallas_src>
import jax
import jax.numpy as jnp
from jax.experimental import pallas as pl
from jax.experimental.pallas import tpu as pltpu


# ----------------------------------------------------------------------------
# VMEM budgeting helpers (generation aware).
# ----------------------------------------------------------------------------
def _vmem_budget_bytes():
    """~3/4 of physical VMEM, floor 32 MiB, cap 112 MiB."""
    phys = None
    try:
        info = pltpu.get_tpu_info()
        phys = getattr(info, "vmem_capacity_bytes", None)
    except Exception:
        phys = None
    if not phys:
        phys = 64 * 1024 * 1024          # conservative default (v7x per-core VMEM)
    budget = int(phys) * 3 // 4
    return max(32 * 1024 * 1024, min(budget, 112 * 1024 * 1024))


def _estimate_vmem_bytes(N, F_in, H1, H2, Hp, C, row_block, itemsize):
    """Rough resident-VMEM estimate for one grid step."""
    adj = 2 * row_block * N * itemsize                       # adj row tile, 2 buffers
    x_b = N * F_in * itemsize
    weights = itemsize * (F_in * H1 + H1 * H2) + 4 * (
        H1 + H2 + H2 * Hp + 2 * Hp + H2 * C + C)
    scratch = N * H1 * itemsize + N * H2 * itemsize + 4 * N * (H2 + 2)
    out = 4 * N * C
    return adj + 2 * (x_b + weights) + scratch + out


def _auto_row_block(N, F_in, H1, H2, Hp, C, itemsize, budget):
    """Whole (N, N) view if it fits comfortably; else the largest row tile
    (multiple of 8, divisor of N) that does."""
    if _estimate_vmem_bytes(N, F_in, H1, H2, Hp, C, N, itemsize) <= 0.8 * budget:
        return N
    for tn in (2048, 1024, 512, 256, 128, 64, 32, 16, 8):
        if tn < N and N % tn == 0 and _estimate_vmem_bytes(
                N, F_in, H1, H2, Hp, C, tn, itemsize) <= 0.8 * budget:
            return tn
    return N   # nothing fits cleanly; let the compiler report the real limit


# ----------------------------------------------------------------------------
# Fused kernel factory.  Grid = (M views, 2 phases, R row tiles).
# ----------------------------------------------------------------------------
def _make_hfn_kernel(row_block, num_row_blocks):
    single_tile = (num_row_blocks == 1)

    def kernel(off_ref,                           # scalar prefetch (SMEM)
               x_ref, adj_ref,                    # data
               w1_ref, b1_ref, w2_ref, b2_ref,    # HGNN_conv weights
               wp1_ref, bp1_ref, wp2_ref,         # attention projection
               wm_ref, bm_ref,                    # MLP head
               out_ref,                           # (N, C) output
               xw1_sc, hw2_sc, m_sc, l_sc, acc_sc):
        m = pl.program_id(0)
        ph = pl.program_id(1)
        num_views = pl.num_programs(0)

        if single_tile:
            rows = slice(None)
            is_first = (m == 0) & (ph == 0)
        else:
            r = pl.program_id(2)
            rows = pl.ds(pl.multiple_of(r * row_block, 8), row_block)
            is_first = (m == 0) & (ph == 0) & (r == 0)

        # View-invariant x @ W1 + b1, computed once; online-softmax state init.
        @pl.when(is_first)
        def _init():
            xw1 = jnp.dot(x_ref[...], w1_ref[...],
                          preferred_element_type=jnp.float32) + b1_ref[...]
            xw1_sc[...] = xw1.astype(xw1_sc.dtype)
            m_sc[...] = jnp.full_like(m_sc, -jnp.inf)
            l_sc[...] = jnp.zeros_like(l_sc)
            acc_sc[...] = jnp.zeros_like(acc_sc)

        g = adj_ref[...]                                     # (row_block, N)

        # ---- phase 0: rows of h = relu(G @ xW1); h @ W2 + b2 into scratch ----
        @pl.when(ph == 0)
        def _conv_pass():
            h = jnp.maximum(
                jnp.dot(g, xw1_sc[...], preferred_element_type=jnp.float32), 0.0)
            # TODO(synk): F.dropout between the convs is identity (inference).
            hw2 = jnp.dot(h.astype(w2_ref.dtype), w2_ref[...],
                          preferred_element_type=jnp.float32) + b2_ref[...]
            hw2_sc[rows, :] = hw2.astype(hw2_sc.dtype)

        # ---- phase 1: rows of e = G @ hW2; attention score; online softmax ---
        @pl.when(ph == 1)
        def _attn_pass():
            e = jnp.dot(g, hw2_sc[...], preferred_element_type=jnp.float32)
            t = jnp.tanh(jnp.dot(e.astype(wp1_ref.dtype), wp1_ref[...],
                                 preferred_element_type=jnp.float32) + bp1_ref[...])
            # (Hp, 1) MXU matmul replaced by VPU multiply + lane reduce.
            s = jnp.sum(t * wp2_ref[...], axis=-1, keepdims=True)     # (rows, 1)

            m_prev = m_sc[rows, :]
            m_new = jnp.maximum(m_prev, s)
            alpha = jnp.exp(m_prev - m_new)     # rescale of previous accumulators
            p = jnp.exp(s - m_new)              # weight of the current view
            l_sc[rows, :] = alpha * l_sc[rows, :] + p
            acc_sc[rows, :] = alpha * acc_sc[rows, :] + p * e
            m_sc[rows, :] = m_new

        # ---- finalize (last view, phase 1): normalize -> Linear -> LogSoftmax
        @pl.when((ph == 1) & (m == num_views - 1))
        def _finalize():
            # approx=True would push the divide fully onto the EUP slot at the
            # cost of ~1e-3 relative error in beta; keep the exact reciprocal.
            emb = acc_sc[rows, :] * pl.reciprocal(l_sc[rows, :], approx=False)
            logits = jnp.dot(emb.astype(wm_ref.dtype), wm_ref[...],
                             preferred_element_type=jnp.float32) + bm_ref[...]
            lmax = jnp.max(logits, axis=1, keepdims=True)
            lse = jnp.log(jnp.sum(jnp.exp(logits - lmax), axis=1,
                                  keepdims=True)) + lmax
            out_ref[rows, :] = logits - lse

    return kernel


# ----------------------------------------------------------------------------
# Wrapper: single pallas_call, scalar-prefetch view offset, online attention.
# ----------------------------------------------------------------------------
def hfn_forward(params, x, adj, index, *, compute_dtype=jnp.bfloat16,
                row_block=None):
    # NOTE: int(index[...]) bakes the view count into the grid, so each distinct
    # (i0, i1) pair recompiles the kernel (flagged in review; acceptable here).
    i0, i1 = int(index[0]), int(index[1])
    M = i1 - i0
    assert M >= 1, "empty view slice"
    N, F_in = x.shape
    H1 = params["w1"].shape[1]
    H2 = params["w2"].shape[1]
    Hp = params["wp1"].shape[1]
    C = params["wm"].shape[1]

    cd = jnp.dtype(compute_dtype)
    budget = _vmem_budget_bytes()
    if row_block is None:
        row_block = _auto_row_block(N, F_in, H1, H2, Hp, C, cd.itemsize, budget)
    assert N % row_block == 0, "row_block must divide N"
    assert row_block == N or row_block % 8 == 0, "row tile must be a multiple of 8"
    R = N // row_block

    # Cast the bandwidth-dominant operands (adj, x, W1, W2) to the compute
    # dtype; accumulation stays f32 inside the kernel.  If adj is not already
    # stored in the compute dtype, slice first so only the used views are
    # copied (offset becomes 0); otherwise pass it untouched (zero-copy) and
    # use the scalar-prefetched offset.
    x_c = x.astype(cd)
    w1_c = params["w1"].astype(cd)
    w2_c = params["w2"].astype(cd)
    if adj.dtype == cd:
        adj_c, off0 = adj, i0
    else:
        adj_c, off0 = adj[i0:i1].astype(cd), 0
    off = jnp.array([off0], dtype=jnp.int32)

    b1 = params["b1"].astype(jnp.float32)
    b2 = params["b2"].astype(jnp.float32)
    wp1 = params["wp1"].astype(jnp.float32)
    bp1 = params["bp1"].astype(jnp.float32)
    wp2_row = params["wp2"].reshape(1, -1).astype(jnp.float32)    # (1, Hp) row
    wm = params["wm"].astype(jnp.float32)
    bm = params["bm"].astype(jnp.float32)

    kernel = _make_hfn_kernel(row_block, R)

    # Advisory cost estimate (adj traffic dominates HBM bytes).
    adj_reads_per_view = 1 if R == 1 else 2
    flops = (2 * N * F_in * H1
             + M * (2 * N * N * H1 + 2 * N * H1 * H2 + 2 * N * N * H2
                    + 2 * N * H2 * Hp + 2 * N * Hp)
             + 2 * N * H2 * C)
    transcendentals = M * N * (Hp + 2) + 2 * N * C
    bytes_accessed = (cd.itemsize * (M * adj_reads_per_view * N * N + N * F_in
                                     + F_in * H1 + H1 * H2)
                      + 4 * (H1 + H2 + H2 * Hp + 2 * Hp + H2 * C + C + N * C))

    def call(single_buffer_invariants):
        def inv_spec(shape, index_map):
            # Grid-invariant operands need only one VMEM buffer (their block
            # index never changes); adj keeps the default double buffering.
            if single_buffer_invariants:
                return pl.BlockSpec(shape, index_map,
                                    pipeline_mode=pl.Buffered(1))
            return pl.BlockSpec(shape, index_map)

        const = lambda m, ph, r, off: (0, 0)
        grid_spec = pltpu.PrefetchScalarGridSpec(
            num_scalar_prefetch=1,
            grid=(M, 2, R),
            in_specs=[
                inv_spec((N, F_in), const),                                  # x
                pl.BlockSpec((None, row_block, N),
                             lambda m, ph, r, off: (off[0] + m, r, 0)),      # adj
                inv_spec((F_in, H1), const),                                 # W1
                inv_spec((1, H1), const),                                    # b1
                inv_spec((H1, H2), const),                                   # W2
                inv_spec((1, H2), const),                                    # b2
                inv_spec((H2, Hp), const),                                   # Wp1
                inv_spec((1, Hp), const),                                    # bp1
                inv_spec((1, Hp), const),                                    # Wp2 row
                inv_spec((H2, C), const),                                    # Wm
                inv_spec((1, C), const),                                     # bm
            ],
            # Output block index constant across the grid: resident accumulator,
            # written only during the last view's phase-1 steps.
            out_specs=pl.BlockSpec((N, C), const),
            scratch_shapes=[
                pltpu.VMEM((N, H1), cd),            # xW1 + b1 (view-invariant)
                pltpu.VMEM((N, H2), cd),            # h @ W2 + b2 of current view
                pltpu.VMEM((N, 1), jnp.float32),    # running max of scores
                pltpu.VMEM((N, 1), jnp.float32),    # running softmax denominator
                pltpu.VMEM((N, H2), jnp.float32),   # running weighted embedding
            ],
        )
        return pl.pallas_call(
            kernel,
            out_shape=jax.ShapeDtypeStruct((N, C), jnp.float32),
            grid_spec=grid_spec,
            compiler_params=pltpu.CompilerParams(
                # All axes carry scratch state -> reduction-style ordering.
                dimension_semantics=("arbitrary", "arbitrary", "arbitrary"),
                vmem_limit_bytes=budget,
            ),
            cost_estimate=pl.CostEstimate(
                flops=flops,
                transcendentals=transcendentals,
                bytes_accessed=bytes_accessed,
            ),
        )(off, x_c, adj_c, w1_c, b1, w2_c, b2, wp1, bp1, wp2_row, wm, bm)

    try:
        return call(single_buffer_invariants=True)
    except Exception:
        # pipeline_mode / pl.Buffered not supported on this jax version.
        return call(single_buffer_invariants=False)


# ----------------------------------------------------------------------------
# Pure-JAX reference (mirrors the PyTorch forward, dropout = identity).
# compute_dtype emulates the kernel's mixed-precision casts for validation.
# ----------------------------------------------------------------------------
def hfn_reference(params, x, adj, index, compute_dtype=jnp.float32):
    cd = jnp.dtype(compute_dtype)
    i0, i1 = int(index[0]), int(index[1])
    xw1 = (jnp.dot(x.astype(cd), params["w1"].astype(cd),
                   preferred_element_type=jnp.float32) + params["b1"]).astype(cd)
    embs = []
    for m in range(i0, i1):
        G = adj[m].astype(cd)
        h = jnp.maximum(jnp.dot(G, xw1, preferred_element_type=jnp.float32), 0.0)
        hw2 = (jnp.dot(h.astype(cd), params["w2"].astype(cd),
                       preferred_element_type=jnp.float32) + params["b2"]).astype(cd)
        e = jnp.dot(G, hw2, preferred_element_type=jnp.float32)
        embs.append(e)
    z = jnp.stack(embs, axis=1)                                      # (N, M, H2)
    w = jnp.tanh(z @ params["wp1"] + params["bp1"]) @ params["wp2"]  # (N, M, 1)
    beta = jax.nn.softmax(w, axis=1)
    emb = (beta * z).sum(axis=1)                                     # (N, H2)
    logits = emb @ params["wm"] + params["bm"]
    return jax.nn.log_softmax(logits, axis=1)


if __name__ == "__main__":
    # Small shapes consistent with the module (args.mlp = True).
    nfeat, nhid1, nhid2, nclass, attn_hid = 16, 32, 16, 4, 16

    key = jax.random.PRNGKey(0)
    keys = jax.random.split(key, 16)

    def init(k, shape, scale):
        return (scale * jax.random.normal(k, shape)).astype(jnp.float32)

    params = {
        # HGNN_conv 1 / 2
        "w1": init(keys[0], (nfeat, nhid1), 1.0 / jnp.sqrt(nfeat)),
        "b1": init(keys[1], (1, nhid1), 0.1),
        "w2": init(keys[2], (nhid1, nhid2), 1.0 / jnp.sqrt(nhid1)),
        "b2": init(keys[3], (1, nhid2), 0.1),
        # Attention: Linear(nhid2, attn_hid) -> Tanh -> Linear(attn_hid, 1, no bias)
        "wp1": init(keys[4], (nhid2, attn_hid), 1.0 / jnp.sqrt(nhid2)),
        "bp1": init(keys[5], (1, attn_hid), 0.1),
        "wp2": init(keys[6], (attn_hid, 1), 1.0 / jnp.sqrt(attn_hid)),
        # MLP head: Linear(nhid2, nclass) + LogSoftmax
        "wm": init(keys[7], (nhid2, nclass), 1.0 / jnp.sqrt(nhid2)),
        "bm": init(keys[8], (1, nclass), 0.1),
    }

    # ---- case 1: small graph, whole-view adj blocks (R == 1) ----------------
    N1, M_total1, index1 = 8, 3, (1, 3)
    x1 = jax.random.normal(keys[9], (N1, nfeat), dtype=jnp.float32)
    adj1 = jax.random.uniform(keys[10], (M_total1, N1, N1), dtype=jnp.float32)

    # Exact f32 mode validates the semantics tightly.
    out_f32 = jax.block_until_ready(
        hfn_forward(params, x1, adj1, index1, compute_dtype=jnp.float32))
    ref_f32 = hfn_reference(params, x1, adj1, index1, jnp.float32)
    assert out_f32.shape == (N1, nclass), out_f32.shape
    assert jnp.allclose(out_f32, ref_f32, atol=1e-4, rtol=1e-4), (
        float(jnp.max(jnp.abs(out_f32 - ref_f32))))

    # Default bf16 compute path vs a precision-matched reference.
    out_bf16 = jax.block_until_ready(hfn_forward(params, x1, adj1, index1))
    ref_bf16 = hfn_reference(params, x1, adj1, index1, jnp.bfloat16)
    assert jnp.allclose(out_bf16, ref_bf16, atol=1e-2, rtol=1e-2), (
        float(jnp.max(jnp.abs(out_bf16 - ref_bf16))))

    # ---- case 2: larger graph, forced adj row-tiling (two-pass, R == 2) -----
    N2, M_total2, index2 = 16, 3, (0, 3)
    x2 = jax.random.normal(keys[11], (N2, nfeat), dtype=jnp.float32)
    adj2 = jax.random.uniform(keys[12], (M_total2, N2, N2), dtype=jnp.float32)

    out_rt = jax.block_until_ready(
        hfn_forward(params, x2, adj2, index2,
                    compute_dtype=jnp.float32, row_block=8))
    ref_rt = hfn_reference(params, x2, adj2, index2, jnp.float32)
    assert out_rt.shape == (N2, nclass), out_rt.shape
    assert jnp.allclose(out_rt, ref_rt, atol=1e-4, rtol=1e-4), (
        float(jnp.max(jnp.abs(out_rt - ref_rt))))

    print("KERNEL_OK")
</pallas_src>

<mosaic_0001>
module attributes {stable_mosaic.version = 11 : i64} {
  func.func @kernel(%arg0: i32, %arg1: i32, %arg2: i32, %arg3: memref<1xi32, #tpu.memory_space<smem>>, %arg4: memref<8x16xf32, #tpu.memory_space<vmem>>, %arg5: memref<1x8x8xf32, #tpu.memory_space<vmem>>, %arg6: memref<16x32xf32, #tpu.memory_space<vmem>>, %arg7: memref<1x32xf32, #tpu.memory_space<vmem>>, %arg8: memref<32x16xf32, #tpu.memory_space<vmem>>, %arg9: memref<1x16xf32, #tpu.memory_space<vmem>>, %arg10: memref<16x16xf32, #tpu.memory_space<vmem>>, %arg11: memref<1x16xf32, #tpu.memory_space<vmem>>, %arg12: memref<1x16xf32, #tpu.memory_space<vmem>>, %arg13: memref<16x4xf32, #tpu.memory_space<vmem>>, %arg14: memref<1x4xf32, #tpu.memory_space<vmem>>, %arg15: memref<8x4xf32, #tpu.memory_space<vmem>>, %arg16: memref<8x32xf32, #tpu.memory_space<vmem>>, %arg17: memref<8x16xf32, #tpu.memory_space<vmem>>, %arg18: memref<8x1xf32, #tpu.memory_space<vmem>>, %arg19: memref<8x1xf32, #tpu.memory_space<vmem>>, %arg20: memref<8x16xf32, #tpu.memory_space<vmem>>) attributes {dimension_semantics = [#tpu.dimension_semantics<arbitrary>, #tpu.dimension_semantics<arbitrary>, #tpu.dimension_semantics<arbitrary>], iteration_bounds = array<i64: 2, 2, 1>, scalar_prefetch = 1 : i64, scratch_operands = 5 : i64, tpu.core_type = #tpu.core_type<tc>, window_params = [{pipeline_mode = #tpu.pipeline_mode<synchronous>, transform_indices = @transform_0, window_bounds = array<i64: 8, 16>}, {transform_indices = @transform_1, window_bounds = array<i64: 1, 8, 8>}, {pipeline_mode = #tpu.pipeline_mode<synchronous>, transform_indices = @transform_2, window_bounds = array<i64: 16, 32>}, {pipeline_mode = #tpu.pipeline_mode<synchronous>, transform_indices = @transform_3, window_bounds = array<i64: 1, 32>}, {pipeline_mode = #tpu.pipeline_mode<synchronous>, transform_indices = @transform_4, window_bounds = array<i64: 32, 16>}, {pipeline_mode = #tpu.pipeline_mode<synchronous>, transform_indices = @transform_5, window_bounds = array<i64: 1, 16>}, {pipeline_mode = #tpu.pipeline_mode<synchronous>, transform_indices = @transform_6, window_bounds = array<i64: 16, 16>}, {pipeline_mode = #tpu.pipeline_mode<synchronous>, transform_indices = @transform_7, window_bounds = array<i64: 1, 16>}, {pipeline_mode = #tpu.pipeline_mode<synchronous>, transform_indices = @transform_8, window_bounds = array<i64: 1, 16>}, {pipeline_mode = #tpu.pipeline_mode<synchronous>, transform_indices = @transform_9, window_bounds = array<i64: 16, 4>}, {pipeline_mode = #tpu.pipeline_mode<synchronous>, transform_indices = @transform_10, window_bounds = array<i64: 1, 4>}, {pipeline_mode = #tpu.pipeline_mode<synchronous>, transform_indices = @transform_11, window_bounds = array<i64: 8, 4>}]} {
    %c0_i32 = arith.constant 0 : i32
    %0 = arith.cmpi eq, %arg0, %c0_i32 : i32
    %c0_i32_0 = arith.constant 0 : i32
    %1 = arith.cmpi eq, %arg1, %c0_i32_0 : i32
    %2 = arith.andi %0, %1 : i1
    %3 = arith.extui %2 : i1 to i32
    %c0_i32_1 = arith.constant 0 : i32
    %4 = arith.cmpi ne, %3, %c0_i32_1 : i32
    scf.if %4 {
      %c0_10 = arith.constant 0 : index
      %c0_11 = arith.constant 0 : index
      %18 = vector.load %arg4[%c0_10, %c0_11] : memref<8x16xf32, #tpu.memory_space<vmem>>, vector<8x16xf32>
      %c0_12 = arith.constant 0 : index
      %c0_13 = arith.constant 0 : index
      %19 = vector.load %arg6[%c0_12, %c0_13] : memref<16x32xf32, #tpu.memory_space<vmem>>, vector<16x32xf32>
      %cst = arith.constant dense<0.000000e+00> : vector<8x32xf32>
      %20 = tpu.matmul %18, %19, %cst {dimension_numbers = #tpu.dot_dimension_numbers<[1], [0], [0], [1], [0, 0, 1, 1], [], []>} : vector<8x16xf32>, vector<16x32xf32>, vector<8x32xf32> -> vector<8x32xf32>
      %c0_14 = arith.constant 0 : index
      %c0_15 = arith.constant 0 : index
      %21 = vector.load %arg7[%c0_14, %c0_15] : memref<1x32xf32, #tpu.memory_space<vmem>>, vector<1x32xf32>
      %22 = vector.broadcast %21 : vector<1x32xf32> to vector<8x32xf32>
      %23 = arith.addf %20, %22 : vector<8x32xf32>
      %c0_16 = arith.constant 0 : index
      %c0_17 = arith.constant 0 : index
      %24 = vector.load %arg16[%c0_16, %c0_17] : memref<8x32xf32, #tpu.memory_space<vmem>>, vector<8x32xf32>
      tpu.vector_store %arg16[%c0_16, %c0_17], %23 {strides = array<i32>} : memref<8x32xf32, #tpu.memory_space<vmem>>, vector<8x32xf32>,
      %cst_18 = arith.constant 0xFF800000 : f32
      %25 = vector.broadcast %cst_18 : f32 to vector<8x1xf32>
      %c0_19 = arith.constant 0 : index
      %c0_20 = arith.constant 0 : index
      %26 = vector.load %arg18[%c0_19, %c0_20] : memref<8x1xf32, #tpu.memory_space<vmem>>, vector<8x1xf32>
      tpu.vector_store %arg18[%c0_19, %c0_20], %25 {strides = array<i32>} : memref<8x1xf32, #tpu.memory_space<vmem>>, vector<8x1xf32>,
      %cst_21 = arith.constant 0.000000e+00 : f32
      %27 = vector.broadcast %cst_21 : f32 to vector<8x1xf32>
      %c0_22 = arith.constant 0 : index
      %c0_23 = arith.constant 0 : index
      %28 = vector.load %arg19[%c0_22, %c0_23] : memref<8x1xf32, #tpu.memory_space<vmem>>, vector<8x1xf32>
      tpu.vector_store %arg19[%c0_22, %c0_23], %27 {strides = array<i32>} : memref<8x1xf32, #tpu.memory_space<vmem>>, vector<8x1xf32>,
      %cst_24 = arith.constant 0.000000e+00 : f32
      %29 = vector.broadcast %cst_24 : f32 to vector<8x16xf32>
      %c0_25 = arith.constant 0 : index
      %c0_26 = arith.constant 0 : index
      %30 = vector.load %arg20[%c0_25, %c0_26] : memref<8x16xf32, #tpu.memory_space<vmem>>, vector<8x16xf32>
      tpu.vector_store %arg20[%c0_25, %c0_26], %29 {strides = array<i32>} : memref<8x16xf32, #tpu.memory_space<vmem>>, vector<8x16xf32>,
    } else {
    }
    %c0 = arith.constant 0 : index
    %c0_2 = arith.constant 0 : index
    %c0_3 = arith.constant 0 : index
    %5 = vector.load %arg5[%c0, %c0_2, %c0_3] : memref<1x8x8xf32, #tpu.memory_space<vmem>>, vector<1x8x8xf32>
    %6 = vector.shape_cast %5 : vector<1x8x8xf32> to vector<8x8xf32>
    %c0_i32_4 = arith.constant 0 : i32
    %7 = arith.cmpi eq, %arg1, %c0_i32_4 : i32
    %8 = arith.extui %7 : i1 to i32
    %c0_i32_5 = arith.constant 0 : i32
    %9 = arith.cmpi ne, %8, %c0_i32_5 : i32
    scf.if %9 {
      %c0_10 = arith.constant 0 : index
      %c0_11 = arith.constant 0 : index
      %18 = vector.load %arg16[%c0_10, %c0_11] : memref<8x32xf32, #tpu.memory_space<vmem>>, vector<8x32xf32>
      %cst = arith.constant dense<0.000000e+00> : vector<8x32xf32>
      %19 = tpu.matmul %6, %18, %cst {dimension_numbers = #tpu.dot_dimension_numbers<[1], [0], [0], [1], [0, 0, 1, 1], [], []>} : vector<8x8xf32>, vector<8x32xf32>, vector<8x32xf32> -> vector<8x32xf32>
      %cst_12 = arith.constant 0.000000e+00 : f32
      %20 = vector.broadcast %cst_12 : f32 to vector<8x32xf32>
      %21 = arith.maximumf %19, %20 : vector<8x32xf32>
      %c0_13 = arith.constant 0 : index
      %c0_14 = arith.constant 0 : index
      %22 = vector.load %arg8[%c0_13, %c0_14] : memref<32x16xf32, #tpu.memory_space<vmem>>, vector<32x16xf32>
      %cst_15 = arith.constant dense<0.000000e+00> : vector<8x16xf32>
      %23 = tpu.matmul %21, %22, %cst_15 {dimension_numbers = #tpu.dot_dimension_numbers<[1], [0], [0], [1], [0, 0, 1, 1], [], []>} : vector<8x32xf32>, vector<32x16xf32>, vector<8x16xf32> -> vector<8x16xf32>
      %c0_16 = arith.constant 0 : index
      %c0_17 = arith.constant 0 : index
      %24 = vector.load %arg9[%c0_16, %c0_17] : memref<1x16xf32, #tpu.memory_space<vmem>>, vector<1x16xf32>
      %25 = vector.broadcast %24 : vector<1x16xf32> to vector<8x16xf32>
      %26 = arith.addf %23, %25 : vector<8x16xf32>
      %c0_18 = arith.constant 0 : index
      %c0_19 = arith.constant 0 : index
      %27 = vector.load %arg17[%c0_18, %c0_19] : memref<8x16xf32, #tpu.memory_space<vmem>>, vector<8x16xf32>
      tpu.vector_store %arg17[%c0_18, %c0_19], %26 {strides = array<i32>} : memref<8x16xf32, #tpu.memory_space<vmem>>, vector<8x16xf32>,
    } else {
    }
    %c1_i32 = arith.constant 1 : i32
    %10 = arith.cmpi eq, %arg1, %c1_i32 : i32
    %11 = arith.extui %10 : i1 to i32
    %c0_i32_6 = arith.constant 0 : i32
    %12 = arith.cmpi ne, %11, %c0_i32_6 : i32
    scf.if %12 {
      %c0_10 = arith.constant 0 : index
      %c0_11 = arith.constant 0 : index
      %18 = vector.load %arg17[%c0_10, %c0_11] : memref<8x16xf32, #tpu.memory_space<vmem>>, vector<8x16xf32>
      %cst = arith.constant dense<0.000000e+00> : vector<8x16xf32>
      %19 = tpu.matmul %6, %18, %cst {dimension_numbers = #tpu.dot_dimension_numbers<[1], [0], [0], [1], [0, 0, 1, 1], [], []>} : vector<8x8xf32>, vector<8x16xf32>, vector<8x16xf32> -> vector<8x16xf32>
      %c0_12 = arith.constant 0 : index
      %c0_13 = arith.constant 0 : index
      %20 = vector.load %arg10[%c0_12, %c0_13] : memref<16x16xf32, #tpu.memory_space<vmem>>, vector<16x16xf32>
      %cst_14 = arith.constant dense<0.000000e+00> : vector<8x16xf32>
      %21 = tpu.matmul %19, %20, %cst_14 {dimension_numbers = #tpu.dot_dimension_numbers<[1], [0], [0], [1], [0, 0, 1, 1], [], []>} : vector<8x16xf32>, vector<16x16xf32>, vector<8x16xf32> -> vector<8x16xf32>
      %c0_15 = arith.constant 0 : index
      %c0_16 = arith.constant 0 : index
      %22 = vector.load %arg11[%c0_15, %c0_16] : memref<1x16xf32, #tpu.memory_space<vmem>>, vector<1x16xf32>
      %23 = vector.broadcast %22 : vector<1x16xf32> to vector<8x16xf32>
      %24 = arith.addf %21, %23 : vector<8x16xf32>
      %25 = math.tanh %24 : vector<8x16xf32>
      %c0_17 = arith.constant 0 : index
      %c0_18 = arith.constant 0 : index
      %26 = vector.load %arg12[%c0_17, %c0_18] : memref<1x16xf32, #tpu.memory_space<vmem>>, vector<1x16xf32>
      %27 = vector.broadcast %26 : vector<1x16xf32> to vector<8x16xf32>
      %28 = arith.mulf %25, %27 : vector<8x16xf32>
      %cst_19 = arith.constant dense<0.000000e+00> : vector<8xf32>
      %29 = vector.multi_reduction <add>, %28, %cst_19 [1] : vector<8x16xf32> to vector<8xf32>
      %30 = vector.shape_cast %29 : vector<8xf32> to vector<8x1xf32>
      %c0_20 = arith.constant 0 : index
      %c0_21 = arith.constant 0 : index
      %31 = vector.load %arg18[%c0_20, %c0_21] : memref<8x1xf32, #tpu.memory_space<vmem>>, vector<8x1xf32>
      %32 = arith.maximumf %31, %30 : vector<8x1xf32>
      %33 = arith.subf %31, %32 : vector<8x1xf32>
      %34 = math.exp %33 : vector<8x1xf32>
      %35 = arith.subf %30, %32 : vector<8x1xf32>
      %36 = math.exp %35 : vector<8x1xf32>
      %c0_22 = arith.constant 0 : index
      %c0_23 = arith.constant 0 : index
      %37 = vector.load %arg19[%c0_22, %c0_23] : memref<8x1xf32, #tpu.memory_space<vmem>>, vector<8x1xf32>
      %38 = arith.mulf %34, %37 : vector<8x1xf32>
      %39 = arith.addf %38, %36 : vector<8x1xf32>
      %c0_24 = arith.constant 0 : index
      %c0_25 = arith.constant 0 : index
      %40 = vector.load %arg19[%c0_24, %c0_25] : memref<8x1xf32, #tpu.memory_space<vmem>>, vector<8x1xf32>
      tpu.vector_store %arg19[%c0_24, %c0_25], %39 {strides = array<i32>} : memref<8x1xf32, #tpu.memory_space<vmem>>, vector<8x1xf32>,
      %c0_26 = arith.constant 0 : index
      %c0_27 = arith.constant 0 : index
      %41 = vector.load %arg20[%c0_26, %c0_27] : memref<8x16xf32, #tpu.memory_space<vmem>>, vector<8x16xf32>
      %42 = vector.broadcast %34 : vector<8x1xf32> to vector<8x16xf32>
      %43 = arith.mulf %42, %41 : vector<8x16xf32>
      %44 = vector.broadcast %36 : vector<8x1xf32> to vector<8x16xf32>
      %45 = arith.mulf %44, %19 : vector<8x16xf32>
      %46 = arith.addf %43, %45 : vector<8x16xf32>
      %c0_28 = arith.constant 0 : index
      %c0_29 = arith.constant 0 : index
      %47 = vector.load %arg20[%c0_28, %c0_29] : memref<8x16xf32, #tpu.memory_space<vmem>>, vector<8x16xf32>
      tpu.vector_store %arg20[%c0_28, %c0_29], %46 {strides = array<i32>} : memref<8x16xf32, #tpu.memory_space<vmem>>, vector<8x16xf32>,
      %c0_30 = arith.constant 0 : index
      %c0_31 = arith.constant 0 : index
      %48 = vector.load %arg18[%c0_30, %c0_31] : memref<8x1xf32, #tpu.memory_space<vmem>>, vector<8x1xf32>
      tpu.vector_store %arg18[%c0_30, %c0_31], %32 {strides = array<i32>} : memref<8x1xf32, #tpu.memory_space<vmem>>, vector<8x1xf32>,
    } else {
    }
    %c1_i32_7 = arith.constant 1 : i32
    %13 = arith.cmpi eq, %arg1, %c1_i32_7 : i32
    %c1_i32_8 = arith.constant 1 : i32
    %14 = arith.cmpi eq, %arg0, %c1_i32_8 : i32
    %15 = arith.andi %13, %14 : i1
    %16 = arith.extui %15 : i1 to i32
    %c0_i32_9 = arith.constant 0 : i32
    %17 = arith.cmpi ne, %16, %c0_i32_9 : i32
    scf.if %17 {
      %c0_10 = arith.constant 0 : index
      %c0_11 = arith.constant 0 : index
      %18 = vector.load %arg20[%c0_10, %c0_11] : memref<8x16xf32, #tpu.memory_space<vmem>>, vector<8x16xf32>
      %c0_12 = arith.constant 0 : index
      %c0_13 = arith.constant 0 : index
      %19 = vector.load %arg19[%c0_12, %c0_13] : memref<8x1xf32, #tpu.memory_space<vmem>>, vector<8x1xf32>
      %20 = tpu.reciprocal %19 : vector<8x1xf32> -> vector<8x1xf32>
      %21 = vector.broadcast %20 : vector<8x1xf32> to vector<8x16xf32>
      %22 = arith.mulf %18, %21 : vector<8x16xf32>
      %c0_14 = arith.constant 0 : index
      %c0_15 = arith.constant 0 : index
      %23 = vector.load %arg13[%c0_14, %c0_15] : memref<16x4xf32, #tpu.memory_space<vmem>>, vector<16x4xf32>
      %cst = arith.constant dense<0.000000e+00> : vector<8x4xf32>
      %24 = tpu.matmul %22, %23, %cst {dimension_numbers = #tpu.dot_dimension_numbers<[1], [0], [0], [1], [0, 0, 1, 1], [], []>} : vector<8x16xf32>, vector<16x4xf32>, vector<8x4xf32> -> vector<8x4xf32>
      %c0_16 = arith.constant 0 : index
      %c0_17 = arith.constant 0 : index
      %25 = vector.load %arg14[%c0_16, %c0_17] : memref<1x4xf32, #tpu.memory_space<vmem>>, vector<1x4xf32>
      %26 = vector.broadcast %25 : vector<1x4xf32> to vector<8x4xf32>
      %27 = arith.addf %24, %26 : vector<8x4xf32>
      %cst_18 = arith.constant dense<0xFF800000> : vector<8xf32>
      %28 = vector.multi_reduction <maximumf>, %27, %cst_18 [1] : vector<8x4xf32> to vector<8xf32>
      %29 = vector.shape_cast %28 : vector<8xf32> to vector<8x1xf32>
      %30 = vector.broadcast %29 : vector<8x1xf32> to vector<8x4xf32>
      %31 = arith.subf %27, %30 : vector<8x4xf32>
      %32 = math.exp %31 : vector<8x4xf32>
      %cst_19 = arith.constant dense<0.000000e+00> : vector<8xf32>
      %33 = vector.multi_reduction <add>, %32, %cst_19 [1] : vector<8x4xf32> to vector<8xf32>
      %34 = vector.shape_cast %33 : vector<8xf32> to vector<8x1xf32>
      %35 = math.log %34 : vector<8x1xf32>
      %36 = arith.addf %35, %29 : vector<8x1xf32>
      %37 = vector.broadcast %36 : vector<8x1xf32> to vector<8x4xf32>
      %38 = arith.subf %27, %37 : vector<8x4xf32>
      %c0_20 = arith.constant 0 : index
      %c0_21 = arith.constant 0 : index
      %39 = vector.load %arg15[%c0_20, %c0_21] : memref<8x4xf32, #tpu.memory_space<vmem>>, vector<8x4xf32>
      tpu.vector_store %arg15[%c0_20, %c0_21], %38 {strides = array<i32>} : memref<8x4xf32, #tpu.memory_space<vmem>>, vector<8x4xf32>,
    } else {
    }
    return
  }
  func.func @transform_0(%arg0: i32, %arg1: i32, %arg2: i32, %arg3: memref<1xi32, #tpu.memory_space<smem>>) -> (i32, i32) {
    %c0_i32 = arith.constant 0 : i32
    %c0_i32_0 = arith.constant 0 : i32
    %c0_i32_1 = arith.constant 0 : i32
    return %c0_i32, %c0_i32_0 : i32, i32
  }
  func.func @transform_1(%arg0: i32, %arg1: i32, %arg2: i32, %arg3: memref<1xi32, #tpu.memory_space<smem>>) -> (i32, i32, i32) {
    %c0 = arith.constant 0 : index
    %0 = memref.load %arg3[%c0] : memref<1xi32, #tpu.memory_space<smem>>
    %1 = arith.addi %0, %arg0 : i32
    %c0_i32 = arith.constant 0 : i32
    %c0_i32_0 = arith.constant 0 : i32
    return %1, %arg2, %c0_i32 : i32, i32, i32
  }
  func.func @transform_2(%arg0: i32, %arg1: i32, %arg2: i32, %arg3: memref<1xi32, #tpu.memory_space<smem>>) -> (i32, i32) {
    %c0_i32 = arith.constant 0 : i32
    %c0_i32_0 = arith.constant 0 : i32
    %c0_i32_1 = arith.constant 0 : i32
    return %c0_i32, %c0_i32_0 : i32, i32
  }
  func.func @transform_3(%arg0: i32, %arg1: i32, %arg2: i32, %arg3: memref<1xi32, #tpu.memory_space<smem>>) -> (i32, i32) {
    %c0_i32 = arith.constant 0 : i32
    %c0_i32_0 = arith.constant 0 : i32
    %c0_i32_1 = arith.constant 0 : i32
    return %c0_i32, %c0_i32_0 : i32, i32
  }
  func.func @transform_4(%arg0: i32, %arg1: i32, %arg2: i32, %arg3: memref<1xi32, #tpu.memory_space<smem>>) -> (i32, i32) {
    %c0_i32 = arith.constant 0 : i32
    %c0_i32_0 = arith.constant 0 : i32
    %c0_i32_1 = arith.constant 0 : i32
    return %c0_i32, %c0_i32_0 : i32, i32
  }
  func.func @transform_5(%arg0: i32, %arg1: i32, %arg2: i32, %arg3: memref<1xi32, #tpu.memory_space<smem>>) -> (i32, i32) {
    %c0_i32 = arith.constant 0 : i32
    %c0_i32_0 = arith.constant 0 : i32
    %c0_i32_1 = arith.constant 0 : i32
    return %c0_i32, %c0_i32_0 : i32, i32
  }
  func.func @transform_6(%arg0: i32, %arg1: i32, %arg2: i32, %arg3: memref<1xi32, #tpu.memory_space<smem>>) -> (i32, i32) {
    %c0_i32 = arith.constant 0 : i32
    %c0_i32_0 = arith.constant 0 : i32
    %c0_i32_1 = arith.constant 0 : i32
    return %c0_i32, %c0_i32_0 : i32, i32
  }
  func.func @transform_7(%arg0: i32, %arg1: i32, %arg2: i32, %arg3: memref<1xi32, #tpu.memory_space<smem>>) -> (i32, i32) {
    %c0_i32 = arith.constant 0 : i32
    %c0_i32_0 = arith.constant 0 : i32
    %c0_i32_1 = arith.constant 0 : i32
    return %c0_i32, %c0_i32_0 : i32, i32
  }
  func.func @transform_8(%arg0: i32, %arg1: i32, %arg2: i32, %arg3: memref<1xi32, #tpu.memory_space<smem>>) -> (i32, i32) {
    %c0_i32 = arith.constant 0 : i32
    %c0_i32_0 = arith.constant 0 : i32
    %c0_i32_1 = arith.constant 0 : i32
    return %c0_i32, %c0_i32_0 : i32, i32
  }
  func.func @transform_9(%arg0: i32, %arg1: i32, %arg2: i32, %arg3: memref<1xi32, #tpu.memory_space<smem>>) -> (i32, i32) {
    %c0_i32 = arith.constant 0 : i32
    %c0_i32_0 = arith.constant 0 : i32
    %c0_i32_1 = arith.constant 0 : i32
    return %c0_i32, %c0_i32_0 : i32, i32
  }
  func.func @transform_10(%arg0: i32, %arg1: i32, %arg2: i32, %arg3: memref<1xi32, #tpu.memory_space<smem>>) -> (i32, i32) {
    %c0_i32 = arith.constant 0 : i32
    %c0_i32_0 = arith.constant 0 : i32
    %c0_i32_1 = arith.constant 0 : i32
    return %c0_i32, %c0_i32_0 : i32, i32
  }
  func.func @transform_11(%arg0: i32, %arg1: i32, %arg2: i32, %arg3: memref<1xi32, #tpu.memory_space<smem>>) -> (i32, i32) {
    %c0_i32 = arith.constant 0 : i32
    %c0_i32_0 = arith.constant 0 : i32
    %c0_i32_1 = arith.constant 0 : i32
    return %c0_i32, %c0_i32_0 : i32, i32
  }
}

module attributes {stable_mosaic.version = 11 : i64} {
  func.func @kernel(%arg0: i32, %arg1: i32, %arg2: i32, %arg3: memref<1xi32, #tpu.memory_space<smem>>, %arg4: memref<8x16xf32, #tpu.memory_space<vmem>>, %arg5: memref<1x8x8xf32, #tpu.memory_space<vmem>>, %arg6: memref<16x32xf32, #tpu.memory_space<vmem>>, %arg7: memref<1x32xf32, #tpu.memory_space<vmem>>, %arg8: memref<32x16xf32, #tpu.memory_space<vmem>>, %arg9: memref<1x16xf32, #tpu.memory_space<vmem>>, %arg10: memref<16x16xf32, #tpu.memory_space<vmem>>, %arg11: memref<1x16xf32, #tpu.memory_space<vmem>>, %arg12: memref<1x16xf32, #tpu.memory_space<vmem>>, %arg13: memref<16x4xf32, #tpu.memory_space<vmem>>, %arg14: memref<1x4xf32, #tpu.memory_space<vmem>>, %arg15: memref<8x4xf32, #tpu.memory_space<vmem>>, %arg16: memref<8x32xf32, #tpu.memory_space<vmem>>, %arg17: memref<8x16xf32, #tpu.memory_space<vmem>>, %arg18: memref<8x1xf32, #tpu.memory_space<vmem>>, %arg19: memref<8x1xf32, #tpu.memory_space<vmem>>, %arg20: memref<8x16xf32, #tpu.memory_space<vmem>>) attributes {dimension_semantics = [#tpu.dimension_semantics<arbitrary>, #tpu.dimension_semantics<arbitrary>, #tpu.dimension_semantics<arbitrary>], iteration_bounds = array<i64: 2, 2, 1>, scalar_prefetch = 1 : i64, scratch_operands = 5 : i64, tpu.core_type = #tpu.core_type<tc>, window_params = [{pipeline_mode = #tpu.pipeline_mode<synchronous>, transform_indices = @transform_0, window_bounds = array<i64: 8, 16>}, {transform_indices = @transform_1, window_bounds = array<i64: 1, 8, 8>}, {pipeline_mode = #tpu.pipeline_mode<synchronous>, transform_indices = @transform_2, window_bounds = array<i64: 16, 32>}, {pipeline_mode = #tpu.pipeline_mode<synchronous>, transform_indices = @transform_3, window_bounds = array<i64: 1, 32>}, {pipeline_mode = #tpu.pipeline_mode<synchronous>, transform_indices = @transform_4, window_bounds = array<i64: 32, 16>}, {pipeline_mode = #tpu.pipeline_mode<synchronous>, transform_indices = @transform_5, window_bounds = array<i64: 1, 16>}, {pipeline_mode = #tpu.pipeline_mode<synchronous>, transform_indices = @transform_6, window_bounds = array<i64: 16, 16>}, {pipeline_mode = #tpu.pipeline_mode<synchronous>, transform_indices = @transform_7, window_bounds = array<i64: 1, 16>}, {pipeline_mode = #tpu.pipeline_mode<synchronous>, transform_indices = @transform_8, window_bounds = array<i64: 1, 16>}, {pipeline_mode = #tpu.pipeline_mode<synchronous>, transform_indices = @transform_9, window_bounds = array<i64: 16, 4>}, {pipeline_mode = #tpu.pipeline_mode<synchronous>, transform_indices = @transform_10, window_bounds = array<i64: 1, 4>}, {pipeline_mode = #tpu.pipeline_mode<synchronous>, transform_indices = @transform_11, window_bounds = array<i64: 8, 4>}]} {
    %c0_i32 = arith.constant 0 : i32
    %0 = arith.cmpi eq, %arg0, %c0_i32 : i32
    %c0_i32_0 = arith.constant 0 : i32
    %1 = arith.cmpi eq, %arg1, %c0_i32_0 : i32
    %2 = arith.andi %0, %1 : i1
    %3 = arith.extui %2 : i1 to i32
    %c0_i32_1 = arith.constant 0 : i32
    %4 = arith.cmpi ne, %3, %c0_i32_1 : i32
    scf.if %4 {
      %c0_10 = arith.constant 0 : index
      %c0_11 = arith.constant 0 : index
      %18 = vector.load %arg4[%c0_10, %c0_11] : memref<8x16xf32, #tpu.memory_space<vmem>>, vector<8x16xf32>
      %c0_12 = arith.constant 0 : index
      %c0_13 = arith.constant 0 : index
      %19 = vector.load %arg6[%c0_12, %c0_13] : memref<16x32xf32, #tpu.memory_space<vmem>>, vector<16x32xf32>
      %cst = arith.constant dense<0.000000e+00> : vector<8x32xf32>
      %20 = tpu.matmul %18, %19, %cst {dimension_numbers = #tpu.dot_dimension_numbers<[1], [0], [0], [1], [0, 0, 1, 1], [], []>} : vector<8x16xf32>, vector<16x32xf32>, vector<8x32xf32> -> vector<8x32xf32>
      %c0_14 = arith.constant 0 : index
      %c0_15 = arith.constant 0 : index
      %21 = vector.load %arg7[%c0_14, %c0_15] : memref<1x32xf32, #tpu.memory_space<vmem>>, vector<1x32xf32>
      %22 = vector.broadcast %21 : vector<1x32xf32> to vector<8x32xf32>
      %23 = arith.addf %20, %22 : vector<8x32xf32>
      %c0_16 = arith.constant 0 : index
      %c0_17 = arith.constant 0 : index
      %24 = vector.load %arg16[%c0_16, %c0_17] : memref<8x32xf32, #tpu.memory_space<vmem>>, vector<8x32xf32>
      tpu.vector_store %arg16[%c0_16, %c0_17], %23 {strides = array<i32>} : memref<8x32xf32, #tpu.memory_space<vmem>>, vector<8x32xf32>,
      %cst_18 = arith.constant 0xFF800000 : f32
      %25 = vector.broadcast %cst_18 : f32 to vector<8x1xf32>
      %c0_19 = arith.constant 0 : index
      %c0_20 = arith.constant 0 : index
      %26 = vector.load %arg18[%c0_19, %c0_20] : memref<8x1xf32, #tpu.memory_space<vmem>>, vector<8x1xf32>
      tpu.vector_store %arg18[%c0_19, %c0_20], %25 {strides = array<i32>} : memref<8x1xf32, #tpu.memory_space<vmem>>, vector<8x1xf32>,
      %cst_21 = arith.constant 0.000000e+00 : f32
      %27 = vector.broadcast %cst_21 : f32 to vector<8x1xf32>
      %c0_22 = arith.constant 0 : index
      %c0_23 = arith.constant 0 : index
      %28 = vector.load %arg19[%c0_22, %c0_23] : memref<8x1xf32, #tpu.memory_space<vmem>>, vector<8x1xf32>
      tpu.vector_store %arg19[%c0_22, %c0_23], %27 {strides = array<i32>} : memref<8x1xf32, #tpu.memory_space<vmem>>, vector<8x1xf32>,
      %cst_24 = arith.constant 0.000000e+00 : f32
      %29 = vector.broadcast %cst_24 : f32 to vector<8x16xf32>
      %c0_25 = arith.constant 0 : index
      %c0_26 = arith.constant 0 : index
      %30 = vector.load %arg20[%c0_25, %c0_26] : memref<8x16xf32, #tpu.memory_space<vmem>>, vector<8x16xf32>
      tpu.vector_store %arg20[%c0_25, %c0_26], %29 {strides = array<i32>} : memref<8x16xf32, #tpu.memory_space<vmem>>, vector<8x16xf32>,
    } else {
    }
    %c0 = arith.constant 0 : index
    %c0_2 = arith.constant 0 : index
    %c0_3 = arith.constant 0 : index
    %5 = vector.load %arg5[%c0, %c0_2, %c0_3] : memref<1x8x8xf32, #tpu.memory_space<vmem>>, vector<1x8x8xf32>
    %6 = vector.shape_cast %5 : vector<1x8x8xf32> to vector<8x8xf32>
    %c0_i32_4 = arith.constant 0 : i32
    %7 = arith.cmpi eq, %arg1, %c0_i32_4 : i32
    %8 = arith.extui %7 : i1 to i32
    %c0_i32_5 = arith.constant 0 : i32
    %9 = arith.cmpi ne, %8, %c0_i32_5 : i32
    scf.if %9 {
      %c0_10 = arith.constant 0 : index
      %c0_11 = arith.constant 0 : index
      %18 = vector.load %arg16[%c0_10, %c0_11] : memref<8x32xf32, #tpu.memory_space<vmem>>, vector<8x32xf32>
      %cst = arith.constant dense<0.000000e+00> : vector<8x32xf32>
      %19 = tpu.matmul %6, %18, %cst {dimension_numbers = #tpu.dot_dimension_numbers<[1], [0], [0], [1], [0, 0, 1, 1], [], []>} : vector<8x8xf32>, vector<8x32xf32>, vector<8x32xf32> -> vector<8x32xf32>
      %cst_12 = arith.constant 0.000000e+00 : f32
      %20 = vector.broadcast %cst_12 : f32 to vector<8x32xf32>
      %21 = arith.maximumf %19, %20 : vector<8x32xf32>
      %c0_13 = arith.constant 0 : index
      %c0_14 = arith.constant 0 : index
      %22 = vector.load %arg8[%c0_13, %c0_14] : memref<32x16xf32, #tpu.memory_space<vmem>>, vector<32x16xf32>
      %cst_15 = arith.constant dense<0.000000e+00> : vector<8x16xf32>
      %23 = tpu.matmul %21, %22, %cst_15 {dimension_numbers = #tpu.dot_dimension_numbers<[1], [0], [0], [1], [0, 0, 1, 1], [], []>} : vector<8x32xf32>, vector<32x16xf32>, vector<8x16xf32> -> vector<8x16xf32>
      %c0_16 = arith.constant 0 : index
      %c0_17 = arith.constant 0 : index
      %24 = vector.load %arg9[%c0_16, %c0_17] : memref<1x16xf32, #tpu.memory_space<vmem>>, vector<1x16xf32>
      %25 = vector.broadcast %24 : vector<1x16xf32> to vector<8x16xf32>
      %26 = arith.addf %23, %25 : vector<8x16xf32>
      %c0_18 = arith.constant 0 : index
      %c0_19 = arith.constant 0 : index
      %27 = vector.load %arg17[%c0_18, %c0_19] : memref<8x16xf32, #tpu.memory_space<vmem>>, vector<8x16xf32>
      tpu.vector_store %arg17[%c0_18, %c0_19], %26 {strides = array<i32>} : memref<8x16xf32, #tpu.memory_space<vmem>>, vector<8x16xf32>,
    } else {
    }
    %c1_i32 = arith.constant 1 : i32
    %10 = arith.cmpi eq, %arg1, %c1_i32 : i32
    %11 = arith.extui %10 : i1 to i32
    %c0_i32_6 = arith.constant 0 : i32
    %12 = arith.cmpi ne, %11, %c0_i32_6 : i32
    scf.if %12 {
      %c0_10 = arith.constant 0 : index
      %c0_11 = arith.constant 0 : index
      %18 = vector.load %arg17[%c0_10, %c0_11] : memref<8x16xf32, #tpu.memory_space<vmem>>, vector<8x16xf32>
      %cst = arith.constant dense<0.000000e+00> : vector<8x16xf32>
      %19 = tpu.matmul %6, %18, %cst {dimension_numbers = #tpu.dot_dimension_numbers<[1], [0], [0], [1], [0, 0, 1, 1], [], []>} : vector<8x8xf32>, vector<8x16xf32>, vector<8x16xf32> -> vector<8x16xf32>
      %c0_12 = arith.constant 0 : index
      %c0_13 = arith.constant 0 : index
      %20 = vector.load %arg10[%c0_12, %c0_13] : memref<16x16xf32, #tpu.memory_space<vmem>>, vector<16x16xf32>
      %cst_14 = arith.constant dense<0.000000e+00> : vector<8x16xf32>
      %21 = tpu.matmul %19, %20, %cst_14 {dimension_numbers = #tpu.dot_dimension_numbers<[1], [0], [0], [1], [0, 0, 1, 1], [], []>} : vector<8x16xf32>, vector<16x16xf32>, vector<8x16xf32> -> vector<8x16xf32>
      %c0_15 = arith.constant 0 : index
      %c0_16 = arith.constant 0 : index
      %22 = vector.load %arg11[%c0_15, %c0_16] : memref<1x16xf32, #tpu.memory_space<vmem>>, vector<1x16xf32>
      %23 = vector.broadcast %22 : vector<1x16xf32> to vector<8x16xf32>
      %24 = arith.addf %21, %23 : vector<8x16xf32>
      %25 = math.tanh %24 : vector<8x16xf32>
      %c0_17 = arith.constant 0 : index
      %c0_18 = arith.constant 0 : index
      %26 = vector.load %arg12[%c0_17, %c0_18] : memref<1x16xf32, #tpu.memory_space<vmem>>, vector<1x16xf32>
      %27 = vector.broadcast %26 : vector<1x16xf32> to vector<8x16xf32>
      %28 = arith.mulf %25, %27 : vector<8x16xf32>
      %cst_19 = arith.constant dense<0.000000e+00> : vector<8xf32>
      %29 = vector.multi_reduction <add>, %28, %cst_19 [1] : vector<8x16xf32> to vector<8xf32>
      %30 = vector.shape_cast %29 : vector<8xf32> to vector<8x1xf32>
      %c0_20 = arith.constant 0 : index
      %c0_21 = arith.constant 0 : index
      %31 = vector.load %arg18[%c0_20, %c0_21] : memref<8x1xf32, #tpu.memory_space<vmem>>, vector<8x1xf32>
      %32 = arith.maximumf %31, %30 : vector<8x1xf32>
      %33 = arith.subf %31, %32 : vector<8x1xf32>
      %34 = math.exp %33 : vector<8x1xf32>
      %35 = arith.subf %30, %32 : vector<8x1xf32>
      %36 = math.exp %35 : vector<8x1xf32>
      %c0_22 = arith.constant 0 : index
      %c0_23 = arith.constant 0 : index
      %37 = vector.load %arg19[%c0_22, %c0_23] : memref<8x1xf32, #tpu.memory_space<vmem>>, vector<8x1xf32>
      %38 = arith.mulf %34, %37 : vector<8x1xf32>
      %39 = arith.addf %38, %36 : vector<8x1xf32>
      %c0_24 = arith.constant 0 : index
      %c0_25 = arith.constant 0 : index
      %40 = vector.load %arg19[%c0_24, %c0_25] : memref<8x1xf32, #tpu.memory_space<vmem>>, vector<8x1xf32>
      tpu.vector_store %arg19[%c0_24, %c0_25], %39 {strides = array<i32>} : memref<8x1xf32, #tpu.memory_space<vmem>>, vector<8x1xf32>,
      %c0_26 = arith.constant 0 : index
      %c0_27 = arith.constant 0 : index
      %41 = vector.load %arg20[%c0_26, %c0_27] : memref<8x16xf32, #tpu.memory_space<vmem>>, vector<8x16xf32>
      %42 = vector.broadcast %34 : vector<8x1xf32> to vector<8x16xf32>
      %43 = arith.mulf %42, %41 : vector<8x16xf32>
      %44 = vector.broadcast %36 : vector<8x1xf32> to vector<8x16xf32>
      %45 = arith.mulf %44, %19 : vector<8x16xf32>
      %46 = arith.addf %43, %45 : vector<8x16xf32>
      %c0_28 = arith.constant 0 : index
      %c0_29 = arith.constant 0 : index
      %47 = vector.load %arg20[%c0_28, %c0_29] : memref<8x16xf32, #tpu.memory_space<vmem>>, vector<8x16xf32>
      tpu.vector_store %arg20[%c0_28, %c0_29], %46 {strides = array<i32>} : memref<8x16xf32, #tpu.memory_space<vmem>>, vector<8x16xf32>,
      %c0_30 = arith.constant 0 : index
      %c0_31 = arith.constant 0 : index
      %48 = vector.load %arg18[%c0_30, %c0_31] : memref<8x1xf32, #tpu.memory_space<vmem>>, vector<8x1xf32>
      tpu.vector_store %arg18[%c0_30, %c0_31], %32 {strides = array<i32>} : memref<8x1xf32, #tpu.memory_space<vmem>>, vector<8x1xf32>,
    } else {
    }
    %c1_i32_7 = arith.constant 1 : i32
    %13 = arith.cmpi eq, %arg1, %c1_i32_7 : i32
    %c1_i32_8 = arith.constant 1 : i32
    %14 = arith.cmpi eq, %arg0, %c1_i32_8 : i32
    %15 = arith.andi %13, %14 : i1
    %16 = arith.extui %15 : i1 to i32
    %c0_i32_9 = arith.constant 0 : i32
    %17 = arith.cmpi ne, %16, %c0_i32_9 : i32
    scf.if %17 {
      %c0_10 = arith.constant 0 : index
      %c0_11 = arith.constant 0 : index
      %18 = vector.load %arg20[%c0_10, %c0_11] : memref<8x16xf32, #tpu.memory_space<vmem>>, vector<8x16xf32>
      %c0_12 = arith.constant 0 : index
      %c0_13 = arith.constant 0 : index
      %19 = vector.load %arg19[%c0_12, %c0_13] : memref<8x1xf32, #tpu.memory_space<vmem>>, vector<8x1xf32>
      %20 = tpu.reciprocal %19 : vector<8x1xf32> -> vector<8x1xf32>
      %21 = vector.broadcast %20 : vector<8x1xf32> to vector<8x16xf32>
      %22 = arith.mulf %18, %21 : vector<8x16xf32>
      %c0_14 = arith.constant 0 : index
      %c0_15 = arith.constant 0 : index
      %23 = vector.load %arg13[%c0_14, %c0_15] : memref<16x4xf32, #tpu.memory_space<vmem>>, vector<16x4xf32>
      %cst = arith.constant dense<0.000000e+00> : vector<8x4xf32>
      %24 = tpu.matmul %22, %23, %cst {dimension_numbers = #tpu.dot_dimension_numbers<[1], [0], [0], [1], [0, 0, 1, 1], [], []>} : vector<8x16xf32>, vector<16x4xf32>, vector<8x4xf32> -> vector<8x4xf32>
      %c0_16 = arith.constant 0 : index
      %c0_17 = arith.constant 0 : index
      %25 = vector.load %arg14[%c0_16, %c0_17] : memref<1x4xf32, #tpu.memory_space<vmem>>, vector<1x4xf32>
      %26 = vector.broadcast %25 : vector<1x4xf32> to vector<8x4xf32>
      %27 = arith.addf %24, %26 : vector<8x4xf32>
      %cst_18 = arith.constant dense<0xFF800000> : vector<8xf32>
      %28 = vector.multi_reduction <maximumf>, %27, %cst_18 [1] : vector<8x4xf32> to vector<8xf32>
      %29 = vector.shape_cast %28 : vector<8xf32> to vector<8x1xf32>
      %30 = vector.broadcast %29 : vector<8x1xf32> to vector<8x4xf32>
      %31 = arith.subf %27, %30 : vector<8x4xf32>
      %32 = math.exp %31 : vector<8x4xf32>
      %cst_19 = arith.constant dense<0.000000e+00> : vector<8xf32>
      %33 = vector.multi_reduction <add>, %32, %cst_19 [1] : vector<8x4xf32> to vector<8xf32>
      %34 = vector.shape_cast %33 : vector<8xf32> to vector<8x1xf32>
      %35 = math.log %34 : vector<8x1xf32>
      %36 = arith.addf %35, %29 : vector<8x1xf32>
      %37 = vector.broadcast %36 : vector<8x1xf32> to vector<8x4xf32>
      %38 = arith.subf %27, %37 : vector<8x4xf32>
      %c0_20 = arith.constant 0 : index
      %c0_21 = arith.constant 0 : index
      %39 = vector.load %arg15[%c0_20, %c0_21] : memref<8x4xf32, #tpu.memory_space<vmem>>, vector<8x4xf32>
      tpu.vector_store %arg15[%c0_20, %c0_21], %38 {strides = array<i32>} : memref<8x4xf32, #tpu.memory_space<vmem>>, vector<8x4xf32>,
    } else {
    }
    return
  }
  func.func @transform_0(%arg0: i32, %arg1: i32, %arg2: i32, %arg3: memref<1xi32, #tpu.memory_space<smem>>) -> (i32, i32) {
    %c0_i32 = arith.constant 0 : i32
    %c0_i32_0 = arith.constant 0 : i32
    %c0_i32_1 = arith.constant 0 : i32
    return %c0_i32, %c0_i32_0 : i32, i32
  }
  func.func @transform_1(%arg0: i32, %arg1: i32, %arg2: i32, %arg3: memref<1xi32, #tpu.memory_space<smem>>) -> (i32, i32, i32) {
    %c0 = arith.constant 0 : index
    %0 = memref.load %arg3[%c0] : memref<1xi32, #tpu.memory_space<smem>>
    %1 = arith.addi %0, %arg0 : i32
    %c0_i32 = arith.constant 0 : i32
    %c0_i32_0 = arith.constant 0 : i32
    return %1, %arg2, %c0_i32 : i32, i32, i32
  }
  func.func @transform_2(%arg0: i32, %arg1: i32, %arg2: i32, %arg3: memref<1xi32, #tpu.memory_space<smem>>) -> (i32, i32) {
    %c0_i32 = arith.constant 0 : i32
    %c0_i32_0 = arith.constant 0 : i32
    %c0_i32_1 = arith.constant 0 : i32
    return %c0_i32, %c0_i32_0 : i32, i32
  }
  func.func @transform_3(%arg0: i32, %arg1: i32, %arg2: i32, %arg3: memref<1xi32, #tpu.memory_space<smem>>) -> (i32, i32) {
    %c0_i32 = arith.constant 0 : i32
    %c0_i32_0 = arith.constant 0 : i32
    %c0_i32_1 = arith.constant 0 : i32
    return %c0_i32, %c0_i32_0 : i32, i32
  }
  func.func @transform_4(%arg0: i32, %arg1: i32, %arg2: i32, %arg3: memref<1xi32, #tpu.memory_space<smem>>) -> (i32, i32) {
    %c0_i32 = arith.constant 0 : i32
    %c0_i32_0 = arith.constant 0 : i32
    %c0_i32_1 = arith.constant 0 : i32
    return %c0_i32, %c0_i32_0 : i32, i32
  }
  func.func @transform_5(%arg0: i32, %arg1: i32, %arg2: i32, %arg3: memref<1xi32, #tpu.memory_space<smem>>) -> (i32, i32) {
    %c0_i32 = arith.constant 0 : i32
    %c0_i32_0 = arith.constant 0 : i32
    %c0_i32_1 = arith.constant 0 : i32
    return %c0_i32, %c0_i32_0 : i32, i32
  }
  func.func @transform_6(%arg0: i32, %arg1: i32, %arg2: i32, %arg3: memref<1xi32, #tpu.memory_space<smem>>) -> (i32, i32) {
    %c0_i32 = arith.constant 0 : i32
    %c0_i32_0 = arith.constant 0 : i32
    %c0_i32_1 = arith.constant 0 : i32
    return %c0_i32, %c0_i32_0 : i32, i32
  }
  func.func @transform_7(%arg0: i32, %arg1: i32, %arg2: i32, %arg3: memref<1xi32, #tpu.memory_space<smem>>) -> (i32, i32) {
    %c0_i32 = arith.constant 0 : i32
    %c0_i32_0 = arith.constant 0 : i32
    %c0_i32_1 = arith.constant 0 : i32
    return %c0_i32, %c0_i32_0 : i32, i32
  }
  func.func @transform_8(%arg0: i32, %arg1: i32, %arg2: i32, %arg3: memref<1xi32, #tpu.memory_space<smem>>) -> (i32, i32) {
    %c0_i32 = arith.constant 0 : i32
    %c0_i32_0 = arith.constant 0 : i32
    %c0_i32_1 = arith.constant 0 : i32
    return %c0_i32, %c0_i32_0 : i32, i32
  }
  func.func @transform_9(%arg0: i32, %arg1: i32, %arg2: i32, %arg3: memref<1xi32, #tpu.memory_space<smem>>) -> (i32, i32) {
    %c0_i32 = arith.constant 0 : i32
    %c0_i32_0 = arith.constant 0 : i32
    %c0_i32_1 = arith.constant 0 : i32
    return %c0_i32, %c0_i32_0 : i32, i32
  }
  func.func @transform_10(%arg0: i32, %arg1: i32, %arg2: i32, %arg3: memref<1xi32, #tpu.memory_space<smem>>) -> (i32, i32) {
    %c0_i32 = arith.constant 0 : i32
    %c0_i32_0 = arith.constant 0 : i32
    %c0_i32_1 = arith.constant 0 : i32
    return %c0_i32, %c0_i32_0 : i32, i32
  }
  func.func @transform_11(%arg0: i32, %arg1: i32, %arg2: i32, %arg3: memref<1xi32, #tpu.memory_space<smem>>) -> (i32, i32) {
    %c0_i32 = arith.constant 0 : i32
    %c0_i32_0 = arith.constant 0 : i32
    %c0_i32_1 = arith.constant 0 : i32
    return %c0_i32, %c0_i32_0 : i32, i32
  }
}

</mosaic_0001>

<llo_original>
// kernel: tpu_custom_call.1
$region0: #{tpu_custom_call.1}
  #allocation0 [shape = 'u32[]', space=smem, size = 0x4, offset = 0x4, fixed_abs, tag = 'smem constant byte address 0x4 - core index']
  #allocation1 [shape = 'u32[72,128]{1,0:T(1,128)}', space=vmem, size = 0x9000, scoped, tag = 'internal scratch']
  #allocation2 [shape = 'f32[8,32]{1,0:T(8,128)}', space=vmem, size = 0x1000, scoped, tag = 'scratch operand']
  #allocation3 [shape = 'f32[8,16]{1,0:T(8,128)}', space=vmem, size = 0x1000, scoped, tag = 'scratch operand']
  #allocation4 [shape = 'f32[8,1]{1,0:T(8,128)}', space=vmem, size = 0x1000, scoped, tag = 'scratch operand']
  #allocation5 [shape = 'f32[8,1]{1,0:T(8,128)}', space=vmem, size = 0x1000, scoped, tag = 'scratch operand']
  #allocation6 [shape = 'f32[8,16]{1,0:T(8,128)}', space=vmem, size = 0x1000, scoped, tag = 'scratch operand']
  #allocation7 [shape = 's32[1]{0}', space=sflag, size = 0x4, scoped, tag = 'scoped memory for tpu_custom_call.1']
  #allocation8 [shape = 's32[1]{0:T(128)S(6)}', space=smem, size = 0x200, scoped, tag = 'prefetched SMEM operand 0']
  %s0 = inlined_call_operand.<no memory space> [shape: s32[1], index: 0, kind: input, shape index: {}]
  %s1 = inlined_call_operand.hbm [shape: f32[8,16], index: 1, kind: input, shape index: {}]
  %s2 = inlined_call_operand.vmem [shape: f32[3,8,8], index: 2, kind: input, shape index: {}]
  %s3 = inlined_call_operand.vmem [shape: f32[16,32], index: 3, kind: input, shape index: {}]
  %s4 = inlined_call_operand.hbm [shape: f32[1,32], index: 4, kind: input, shape index: {}]
  %s5 = inlined_call_operand.vmem [shape: f32[32,16], index: 5, kind: input, shape index: {}]
  %s6 = inlined_call_operand.hbm [shape: f32[1,16], index: 6, kind: input, shape index: {}]
  %s7 = inlined_call_operand.vmem [shape: f32[16,16], index: 7, kind: input, shape index: {}]
  %s8 = inlined_call_operand.hbm [shape: f32[1,16], index: 8, kind: input, shape index: {}]
  %s9 = inlined_call_operand.vmem [shape: f32[1,16], index: 9, kind: input, shape index: {}]
  %s10 = inlined_call_operand.vmem [shape: f32[16,4], index: 10, kind: input, shape index: {}]
  %s11 = inlined_call_operand.vmem [shape: f32[1,4], index: 11, kind: input, shape index: {}]
  %s12 = inlined_call_operand.vmem [shape: f32[8,4], index: 12, kind: output, shape index: {}]
  %s13 = sld [smem:[#allocation0]]
  $region109: #{tpu_custom_call.1} parent=0
    _
  %s15 = ssub.s32 1, %s13
  %s16 = scalar_select 0, %s15, %s13
  %17 = sst [smem:[#allocation8]] %s0
  $region1: #{tpu_custom_call.1} parent=0
    #allocation9 [shape = 'u8[4096]{0}', space=vmem, size = 0x1000, scoped, tag = 'input window, operand 1, single buffered']
    #allocation10 [shape = 's32[2]{0}', space=sflag, size = 0x8, scoped, tag = 'scoped memory for tpu_custom_call.1']
    #allocation11 [shape = 'u8[512]{0}', space=vmem, size = 0x400, scoped, tag = 'input window, operand 4, single buffered']
    #allocation12 [shape = 's32[1]{0}', space=sflag, size = 0x4, scoped, tag = 'scoped memory for tpu_custom_call.1']
    #allocation13 [shape = 'u8[512]{0}', space=vmem, size = 0x400, scoped, tag = 'input window, operand 6, single buffered']
    #allocation14 [shape = 'u8[512]{0}', space=vmem, size = 0x400, scoped, tag = 'input window, operand 8, single buffered']
    #allocation15 [shape = 's32[1]{0}', space=sflag, size = 0x4, scoped, tag = 'scoped memory for tpu_custom_call.1']
    %18 = vsyncpa [#allocation10], 0
    %19 = vsyncpa [#allocation12], 0
    %20 = vsyncpa [#allocation15], 0
    loop: start=0, step=1, limit=6
    $region2: #{tpu_custom_call.1} parent=1 // loop_pre_header
      _
    $region3: #{tpu_custom_call.1} parent=1 // loop_header
      %s22 = sphi 0, %s26
      %p23 = scmp.ge.s32.totalorder %s22, 6
      %s29 = sphi 0, %s48
      %s30 = sphi 0, %s44
      %s31 = sphi 0, %s40
      %s32 = sphi 0, %s29
      %s33 = sphi 0, %s30
      %s34 = sphi 0, %s31
      %s35 = sphi 0, %s32
      %s36 = sphi 0, %s33
      %s37 = sphi 0, %s34
      %s49 = sphi 0, %s49
      %s51 = sphi 0, %s49
      %s52 = sphi 0, %s51
      %s66 = sphi 0, %s52
      %s78 = sphi 0, %s80
      %s81 = sphi 0, %s78
      %s82 = sphi 0, %s81
      %s98 = sphi 0, %s82
      %s102 = sphi 0, %s102
      %s104 = sphi 0, %s102
      %s105 = sphi 0, %s104
      %s119 = sphi 0, %s105
      %s123 = sphi 0, %s123
      %s125 = sphi 0, %s123
      %s126 = sphi 0, %s125
      %s140 = sphi 0, %s126
      %s144 = sphi 0, %s144
      %s146 = sphi 0, %s144
      %s147 = sphi 0, %s146
      %s161 = sphi 0, %s147
      %s165 = sphi 0, %s165
      %s167 = sphi 0, %s165
      %s168 = sphi 0, %s167
      %s182 = sphi 0, %s168
      %s186 = sphi 0, %s186
      %s188 = sphi 0, %s186
      %s189 = sphi 0, %s188
      %s203 = sphi 0, %s189
      %s207 = sphi 0, %s207
      %s209 = sphi 0, %s207
      %s210 = sphi 0, %s209
      %s224 = sphi 0, %s210
      %s228 = sphi 0, %s228
      %s230 = sphi 0, %s228
      %s231 = sphi 0, %s230
      %s245 = sphi 0, %s231
      %s249 = sphi 0, %s249
      %s251 = sphi 0, %s249
      %s252 = sphi 0, %s251
      %s266 = sphi 0, %s252
      %s270 = sphi 0, %s270
      %s272 = sphi 0, %s270
      %s273 = sphi 0, %s272
      %s287 = sphi 0, %s273
      %s291 = sphi 0, %s291
      %s293 = sphi 0, %s291
      %s294 = sphi 0, %s293
      %s308 = sphi 0, %s294
    $region4: #{tpu_custom_call.1} parent=1 // loop_header_branch
      %25 = sbr.rel (%p23) target = $region8
    $region5: #{tpu_custom_call.1} parent=1 // loop_body
      %s27 = ssub.s32 %s22, 1
      %s28 = ssub.s32 %s22, 2
      %s38 = sadd.s32 1, %s31
      %p39 = scmp.ge.s32.totalorder %s38, 1
      %s40 = scalar_select %p39, 0, %s38
      %s41 = sadd.s32 1, %s30
      %s42 = scalar_select %p39, %s41, %s30
      %p43 = scmp.ge.s32.totalorder %s42, 2
      %s44 = scalar_select %p43, 0, %s42
      %s45 = sadd.s32 1, %s29
      %s46 = scalar_select %p43, %s45, %s29
      %p47 = scmp.ge.s32.totalorder %s46, 2
      %s48 = scalar_select %p47, 0, %s46
      %s50 = sadd.s32 %s49, 1
      %p53 = scmp.eq.s32.totalorder %s22, 3
      %p54 = scmp.ne.s32.totalorder %s49, %s51
      %p55 = scmp.eq.s32.totalorder %s22, 0
      %p56 = por %p54, %p55
      %p57 = scmp.ne.s32.totalorder %s49, %s51
      %p58 = scmp.eq.s32.totalorder %s27, 3
      %p59 = por %p57, %p58
      %p60 = scmp.ne.s32.totalorder %s51, %s52
      %p61 = scmp.eq.s32.totalorder %s27, 0
      %p62 = por %p60, %p61
      %p63 = scmp.ne.s32.totalorder %s51, %s52
      %p64 = scmp.eq.s32.totalorder %s28, 3
      %p65 = por %p63, %p64
      %p67 = scmp.ne.s32.totalorder %s52, %s66
      %p68 = scmp.eq.s32.totalorder %s28, 0
      %p69 = por %p67, %p68
      %s70 = sld [smem:[#allocation8]]
      %s71 = sadd.s32 %s70, %s29
      %s72 = sld [smem:[#allocation8]]
      %s73 = sadd.s32 %s72, %s48
      %s74 = ssub.s32 %s71, %s73
      %s75 = ssub.s32 %s31, %s40
      %s76 = sor.u32 %s74, %s75
      %p77 = scmp.eq.s32.totalorder %s76, 0
      %s79 = sadd.s32 %s78, 1
      %s80 = scalar_select %p77, %s78, %s79
      %p83 = pneg %p77
      %p84 = scmp.eq.s32.totalorder %s22, 3
      %p85 = por %p83, %p84
      %p86 = scmp.ne.s32.totalorder %s78, %s81
      %p87 = scmp.eq.s32.totalorder %s22, 0
      %p88 = por %p86, %p87
      %p89 = scmp.ne.s32.totalorder %s78, %s81
      %p90 = scmp.eq.s32.totalorder %s27, 3
      %p91 = por %p89, %p90
      %p92 = scmp.ne.s32.totalorder %s81, %s82
      %p93 = scmp.eq.s32.totalorder %s27, 0
      %p94 = por %p92, %p93
      %p95 = scmp.ne.s32.totalorder %s81, %s82
      %p96 = scmp.eq.s32.totalorder %s28, 3
      %p97 = por %p95, %p96
      %p99 = scmp.ne.s32.totalorder %s82, %s98
      %p100 = scmp.eq.s32.totalorder %s28, 0
      %p101 = por %p99, %p100
      %s103 = sadd.s32 %s102, 1
      %p106 = scmp.eq.s32.totalorder %s22, 3
      %p107 = scmp.ne.s32.totalorder %s102, %s104
      %p108 = scmp.eq.s32.totalorder %s22, 0
      %p109 = por %p107, %p108
      %p110 = scmp.ne.s32.totalorder %s102, %s104
      %p111 = scmp.eq.s32.totalorder %s27, 3
      %p112 = por %p110, %p111
      %p113 = scmp.ne.s32.totalorder %s104, %s105
      %p114 = scmp.eq.s32.totalorder %s27, 0
      %p115 = por %p113, %p114
      %p116 = scmp.ne.s32.totalorder %s104, %s105
      %p117 = scmp.eq.s32.totalorder %s28, 3
      %p118 = por %p116, %p117
      %p120 = scmp.ne.s32.totalorder %s105, %s119
      %p121 = scmp.eq.s32.totalorder %s28, 0
      %p122 = por %p120, %p121
      %s124 = sadd.s32 %s123, 1
      %p127 = scmp.eq.s32.totalorder %s22, 3
      %p128 = scmp.ne.s32.totalorder %s123, %s125
      %p129 = scmp.eq.s32.totalorder %s22, 0
      %p130 = por %p128, %p129
      %p131 = scmp.ne.s32.totalorder %s123, %s125
      %p132 = scmp.eq.s32.totalorder %s27, 3
      %p133 = por %p131, %p132
      %p134 = scmp.ne.s32.totalorder %s125, %s126
      %p135 = scmp.eq.s32.totalorder %s27, 0
      %p136 = por %p134, %p135
      %p137 = scmp.ne.s32.totalorder %s125, %s126
      %p138 = scmp.eq.s32.totalorder %s28, 3
      %p139 = por %p137, %p138
      %p141 = scmp.ne.s32.totalorder %s126, %s140
      %p142 = scmp.eq.s32.totalorder %s28, 0
      %p143 = por %p141, %p142
      %s145 = sadd.s32 %s144, 1
      %p148 = scmp.eq.s32.totalorder %s22, 3
      %p149 = scmp.ne.s32.totalorder %s144, %s146
      %p150 = scmp.eq.s32.totalorder %s22, 0
      %p151 = por %p149, %p150
      %p152 = scmp.ne.s32.totalorder %s144, %s146
      %p153 = scmp.eq.s32.totalorder %s27, 3
      %p154 = por %p152, %p153
      %p155 = scmp.ne.s32.totalorder %s146, %s147
      %p156 = scmp.eq.s32.totalorder %s27, 0
      %p157 = por %p155, %p156
      %p158 = scmp.ne.s32.totalorder %s146, %s147
      %p159 = scmp.eq.s32.totalorder %s28, 3
      %p160 = por %p158, %p159
      %p162 = scmp.ne.s32.totalorder %s147, %s161
      %p163 = scmp.eq.s32.totalorder %s28, 0
      %p164 = por %p162, %p163
      %s166 = sadd.s32 %s165, 1
      %p169 = scmp.eq.s32.totalorder %s22, 3
      %p170 = scmp.ne.s32.totalorder %s165, %s167
      %p171 = scmp.eq.s32.totalorder %s22, 0
      %p172 = por %p170, %p171
      %p173 = scmp.ne.s32.totalorder %s165, %s167
      %p174 = scmp.eq.s32.totalorder %s27, 3
      %p175 = por %p173, %p174
      %p176 = scmp.ne.s32.totalorder %s167, %s168
      %p177 = scmp.eq.s32.totalorder %s27, 0
      %p178 = por %p176, %p177
      %p179 = scmp.ne.s32.totalorder %s167, %s168
      %p180 = scmp.eq.s32.totalorder %s28, 3
      %p181 = por %p179, %p180
      %p183 = scmp.ne.s32.totalorder %s168, %s182
      %p184 = scmp.eq.s32.totalorder %s28, 0
      %p185 = por %p183, %p184
      %s187 = sadd.s32 %s186, 1
      %p190 = scmp.eq.s32.totalorder %s22, 3
      %p191 = scmp.ne.s32.totalorder %s186, %s188
      %p192 = scmp.eq.s32.totalorder %s22, 0
      %p193 = por %p191, %p192
      %p194 = scmp.ne.s32.totalorder %s186, %s188
      %p195 = scmp.eq.s32.totalorder %s27, 3
      %p196 = por %p194, %p195
      %p197 = scmp.ne.s32.totalorder %s188, %s189
      %p198 = scmp.eq.s32.totalorder %s27, 0
      %p199 = por %p197, %p198
      %p200 = scmp.ne.s32.totalorder %s188, %s189
      %p201 = scmp.eq.s32.totalorder %s28, 3
      %p202 = por %p200, %p201
      %p204 = scmp.ne.s32.totalorder %s189, %s203
      %p205 = scmp.eq.s32.totalorder %s28, 0
      %p206 = por %p204, %p205
      %s208 = sadd.s32 %s207, 1
      %p211 = scmp.eq.s32.totalorder %s22, 3
      %p212 = scmp.ne.s32.totalorder %s207, %s209
      %p213 = scmp.eq.s32.totalorder %s22, 0
      %p214 = por %p212, %p213
      %p215 = scmp.ne.s32.totalorder %s207, %s209
      %p216 = scmp.eq.s32.totalorder %s27, 3
      %p217 = por %p215, %p216
      %p218 = scmp.ne.s32.totalorder %s209, %s210
      %p219 = scmp.eq.s32.totalorder %s27, 0
      %p220 = por %p218, %p219
      %p221 = scmp.ne.s32.totalorder %s209, %s210
      %p222 = scmp.eq.s32.totalorder %s28, 3
      %p223 = por %p221, %p222
      %p225 = scmp.ne.s32.totalorder %s210, %s224
      %p226 = scmp.eq.s32.totalorder %s28, 0
      %p227 = por %p225, %p226
      %s229 = sadd.s32 %s228, 1
      %p232 = scmp.eq.s32.totalorder %s22, 3
      %p233 = scmp.ne.s32.totalorder %s228, %s230
      %p234 = scmp.eq.s32.totalorder %s22, 0
      %p235 = por %p233, %p234
      %p236 = scmp.ne.s32.totalorder %s228, %s230
      %p237 = scmp.eq.s32.totalorder %s27, 3
      %p238 = por %p236, %p237
      %p239 = scmp.ne.s32.totalorder %s230, %s231
      %p240 = scmp.eq.s32.totalorder %s27, 0
      %p241 = por %p239, %p240
      %p242 = scmp.ne.s32.totalorder %s230, %s231
      %p243 = scmp.eq.s32.totalorder %s28, 3
      %p244 = por %p242, %p243
      %p246 = scmp.ne.s32.totalorder %s231, %s245
      %p247 = scmp.eq.s32.totalorder %s28, 0
      %p248 = por %p246, %p247
      %s250 = sadd.s32 %s249, 1
      %p253 = scmp.eq.s32.totalorder %s22, 3
      %p254 = scmp.ne.s32.totalorder %s249, %s251
      %p255 = scmp.eq.s32.totalorder %s22, 0
      %p256 = por %p254, %p255
      %p257 = scmp.ne.s32.totalorder %s249, %s251
      %p258 = scmp.eq.s32.totalorder %s27, 3
      %p259 = por %p257, %p258
      %p260 = scmp.ne.s32.totalorder %s251, %s252
      %p261 = scmp.eq.s32.totalorder %s27, 0
      %p262 = por %p260, %p261
      %p263 = scmp.ne.s32.totalorder %s251, %s252
      %p264 = scmp.eq.s32.totalorder %s28, 3
      %p265 = por %p263, %p264
      %p267 = scmp.ne.s32.totalorder %s252, %s266
      %p268 = scmp.eq.s32.totalorder %s28, 0
      %p269 = por %p267, %p268
      %s271 = sadd.s32 %s270, 1
      %p274 = scmp.eq.s32.totalorder %s22, 3
      %p275 = scmp.ne.s32.totalorder %s270, %s272
      %p276 = scmp.eq.s32.totalorder %s22, 0
      %p277 = por %p275, %p276
      %p278 = scmp.ne.s32.totalorder %s270, %s272
      %p279 = scmp.eq.s32.totalorder %s27, 3
      %p280 = por %p278, %p279
      %p281 = scmp.ne.s32.totalorder %s272, %s273
      %p282 = scmp.eq.s32.totalorder %s27, 0
      %p283 = por %p281, %p282
      %p284 = scmp.ne.s32.totalorder %s272, %s273
      %p285 = scmp.eq.s32.totalorder %s28, 3
      %p286 = por %p284, %p285
      %p288 = scmp.ne.s32.totalorder %s273, %s287
      %p289 = scmp.eq.s32.totalorder %s28, 0
      %p290 = por %p288, %p289
      %s292 = sadd.s32 %s291, 1
      %p295 = scmp.eq.s32.totalorder %s22, 3
      %p296 = scmp.ne.s32.totalorder %s291, %s293
      %p297 = scmp.eq.s32.totalorder %s22, 0
      %p298 = por %p296, %p297
      %p299 = scmp.ne.s32.totalorder %s291, %s293
      %p300 = scmp.eq.s32.totalorder %s27, 3
      %p301 = por %p299, %p300
      %p302 = scmp.ne.s32.totalorder %s293, %s294
      %p303 = scmp.eq.s32.totalorder %s27, 0
      %p304 = por %p302, %p303
      %p305 = scmp.ne.s32.totalorder %s293, %s294
      %p306 = scmp.eq.s32.totalorder %s28, 3
      %p307 = por %p305, %p306
      %p309 = scmp.ne.s32.totalorder %s294, %s308
      %p310 = scmp.eq.s32.totalorder %s28, 0
      %p311 = por %p309, %p310
      %p312 = scmp.le.s32.totalorder 1, %s22
      %p313 = scmp.lt.s32.totalorder %s22, 5
      %p314 = pnand %p312, %p313
      %p315 = pneg %p314
      // Predicated region
      $region9: #{tpu_custom_call.1} parent=5 // pred_check
        _
      $region10: #{tpu_custom_call.1} parent=5 // pred_check_branch
        %317 = sbr.rel (%p314) target = $region12
      $region11: #{tpu_custom_call.1} parent=5 // pred_region
        %s318 = ssub.s32 %s22, 1
        // Predicated region
        $region13: #{tpu_custom_call.1} parent=11 // pred_check
          %p319 = pneg %p62
        $region14: #{tpu_custom_call.1} parent=11 // pred_check_branch
          %321 = sbr.rel (%p319) target = $region16
        $region15: #{tpu_custom_call.1} parent=11 // pred_region
          %323 = vsyncadd [#allocation10], 0
          %s325 = sshll.u32 %s1, 4
          %s326 = int_to_ptr.hbm [resolvable:$true] %s325
          %s327 = sshll.u32 [#allocation9], 4
          %s328 = int_to_ptr.vmem [resolvable:$true] %s327
          %330 = dma.hbm_to_vmem [thread:$0]  %s326, 128, %s328, [#allocation10]
        $region16: #{tpu_custom_call.1} parent=11 // pred_fallthru
          _
        // Predicated region
        $region17: #{tpu_custom_call.1} parent=11 // pred_check
          %p331 = pneg %p115
        $region18: #{tpu_custom_call.1} parent=11 // pred_check_branch
          %333 = sbr.rel (%p331) target = $region20
        $region19: #{tpu_custom_call.1} parent=11 // pred_region
          _
        $region20: #{tpu_custom_call.1} parent=11 // pred_fallthru
          _
        // Predicated region
        $region21: #{tpu_custom_call.1} parent=11 // pred_check
          %p334 = pneg %p136
        $region22: #{tpu_custom_call.1} parent=11 // pred_check_branch
          %336 = sbr.rel (%p334) target = $region24
        $region23: #{tpu_custom_call.1} parent=11 // pred_region
          %338 = vsyncadd [#allocation12], 0
          %s340 = sshll.u32 %s4, 4
          %s341 = int_to_ptr.hbm [resolvable:$true] %s340
          %s342 = sshll.u32 [#allocation11], 4
          %s343 = int_to_ptr.vmem [resolvable:$true] %s342
          %345 = dma.hbm_to_vmem [thread:$0]  %s341, 16, %s343, [#allocation12]
        $region24: #{tpu_custom_call.1} parent=11 // pred_fallthru
          _
        // Predicated region
        $region25: #{tpu_custom_call.1} parent=11 // pred_check
          %p346 = pneg %p157
        $region26: #{tpu_custom_call.1} parent=11 // pred_check_branch
          %348 = sbr.rel (%p346) target = $region28
        $region27: #{tpu_custom_call.1} parent=11 // pred_region
          _
        $region28: #{tpu_custom_call.1} parent=11 // pred_fallthru
          _
        // Predicated region
        $region29: #{tpu_custom_call.1} parent=11 // pred_check
          %p349 = pneg %p178
        $region30: #{tpu_custom_call.1} parent=11 // pred_check_branch
          %351 = sbr.rel (%p349) target = $region32
        $region31: #{tpu_custom_call.1} parent=11 // pred_region
          %353 = vsyncadd [#allocation12], 0
          %s355 = sshll.u32 %s6, 4
          %s356 = int_to_ptr.hbm [resolvable:$true] %s355
          %s357 = sshll.u32 [#allocation13], 4
          %s358 = int_to_ptr.vmem [resolvable:$true] %s357
          %360 = dma.hbm_to_vmem [thread:$0]  %s356, 16, %s358, [#allocation12]
        $region32: #{tpu_custom_call.1} parent=11 // pred_fallthru
          _
        // Predicated region
        $region33: #{tpu_custom_call.1} parent=11 // pred_check
          %p361 = pneg %p199
        $region34: #{tpu_custom_call.1} parent=11 // pred_check_branch
          %363 = sbr.rel (%p361) target = $region36
        $region35: #{tpu_custom_call.1} parent=11 // pred_region
          _
        $region36: #{tpu_custom_call.1} parent=11 // pred_fallthru
          _
        // Predicated region
        $region37: #{tpu_custom_call.1} parent=11 // pred_check
          %p364 = pneg %p220
        $region38: #{tpu_custom_call.1} parent=11 // pred_check_branch
          %366 = sbr.rel (%p364) target = $region40
        $region39: #{tpu_custom_call.1} parent=11 // pred_region
          %368 = vsyncadd [#allocation15], 0
          %s370 = sshll.u32 %s8, 4
          %s371 = int_to_ptr.hbm [resolvable:$true] %s370
          %s372 = sshll.u32 [#allocation14], 4
          %s373 = int_to_ptr.vmem [resolvable:$true] %s372
          %375 = dma.hbm_to_vmem [thread:$0]  %s371, 16, %s373, [#allocation15]
        $region40: #{tpu_custom_call.1} parent=11 // pred_fallthru
          _
        // Predicated region
        $region41: #{tpu_custom_call.1} parent=11 // pred_check
          %p376 = pneg %p241
        $region42: #{tpu_custom_call.1} parent=11 // pred_check_branch
          %378 = sbr.rel (%p376) target = $region44
        $region43: #{tpu_custom_call.1} parent=11 // pred_region
          _
        $region44: #{tpu_custom_call.1} parent=11 // pred_fallthru
          _
        // Predicated region
        $region45: #{tpu_custom_call.1} parent=11 // pred_check
          %p379 = pneg %p262
        $region46: #{tpu_custom_call.1} parent=11 // pred_check_branch
          %381 = sbr.rel (%p379) target = $region48
        $region47: #{tpu_custom_call.1} parent=11 // pred_region
          _
        $region48: #{tpu_custom_call.1} parent=11 // pred_fallthru
          _
        // Predicated region
        $region49: #{tpu_custom_call.1} parent=11 // pred_check
          %p382 = pneg %p283
        $region50: #{tpu_custom_call.1} parent=11 // pred_check_branch
          %384 = sbr.rel (%p382) target = $region52
        $region51: #{tpu_custom_call.1} parent=11 // pred_region
          _
        $region52: #{tpu_custom_call.1} parent=11 // pred_fallthru
          _
      $region12: #{tpu_custom_call.1} parent=5 // pred_fallthru
        _
      %p385 = scmp.lt.s32.totalorder %s22, 4
      // Predicated region
      $region53: #{tpu_custom_call.1} parent=5 // pred_check
        %p386 = pneg %p385
      $region54: #{tpu_custom_call.1} parent=5 // pred_check_branch
        %388 = sbr.rel (%p386) target = $region56
      $region55: #{tpu_custom_call.1} parent=5 // pred_region
        // Predicated region
        $region57: #{tpu_custom_call.1} parent=55 // pred_check
          %p389 = pneg %p88
        $region58: #{tpu_custom_call.1} parent=55 // pred_check_branch
          %391 = sbr.rel (%p389) target = $region60
        $region59: #{tpu_custom_call.1} parent=55 // pred_region
          %s392 = sld [smem:[#allocation8]]
          %s393 = sadd.s32 %s392, %s29
          %p394 = scmp.lt.s32.totalorder %s393, 2
          %s395 = scalar_select %p394, %s393, 2
          %p396 = scmp.lt.s32.totalorder %s31, 0
          %s397 = scalar_select %p396, %s31, 0
          %s398 = sadd.s32 %s397, %s395
          %s399 = smul.addr %s398, 8
          %s400 = scalar_lea.vmem %s2, %s399
          %s401 = sld [smem:[#allocation8]]
          %s402 = sadd.s32 %s401, %s29
        $region60: #{tpu_custom_call.1} parent=55 // pred_fallthru
          _
      $region56: #{tpu_custom_call.1} parent=5 // pred_fallthru
        _
      %p403 = scmp.le.s32.totalorder 1, %s22
      %p404 = scmp.lt.s32.totalorder %s22, 5
      %p405 = pnand %p403, %p404
      %p406 = pneg %p405
      // Predicated region
      $region61: #{tpu_custom_call.1} parent=5 // pred_check
        _
      $region62: #{tpu_custom_call.1} parent=5 // pred_check_branch
        %408 = sbr.rel (%p405) target = $region64
      $region63: #{tpu_custom_call.1} parent=5 // pred_region
        %s409 = ssub.s32 %s22, 1
        // Predicated region
        $region65: #{tpu_custom_call.1} parent=63 // pred_check
          %p410 = pneg %p62
        $region66: #{tpu_custom_call.1} parent=63 // pred_check_branch
          %412 = sbr.rel (%p410) target = $region68
        $region67: #{tpu_custom_call.1} parent=63 // pred_region
          %414 = dma.done [#allocation10], 128
        $region68: #{tpu_custom_call.1} parent=63 // pred_fallthru
          _
        // Predicated region
        $region69: #{tpu_custom_call.1} parent=63 // pred_check
          %p415 = pneg %p136
        $region70: #{tpu_custom_call.1} parent=63 // pred_check_branch
          %417 = sbr.rel (%p415) target = $region72
        $region71: #{tpu_custom_call.1} parent=63 // pred_region
          %419 = dma.done [#allocation12], 16
        $region72: #{tpu_custom_call.1} parent=63 // pred_fallthru
          _
        // Predicated region
        $region73: #{tpu_custom_call.1} parent=63 // pred_check
          %p420 = pneg %p178
        $region74: #{tpu_custom_call.1} parent=63 // pred_check_branch
          %422 = sbr.rel (%p420) target = $region76
        $region75: #{tpu_custom_call.1} parent=63 // pred_region
          %424 = dma.done [#allocation12], 16
        $region76: #{tpu_custom_call.1} parent=63 // pred_fallthru
          _
        // Predicated region
        $region77: #{tpu_custom_call.1} parent=63 // pred_check
          %p425 = pneg %p220
        $region78: #{tpu_custom_call.1} parent=63 // pred_check_branch
          %427 = sbr.rel (%p425) target = $region80
        $region79: #{tpu_custom_call.1} parent=63 // pred_region
          %429 = dma.done [#allocation15], 16
        $region80: #{tpu_custom_call.1} parent=63 // pred_fallthru
          _
        %p430 = pneg %p62
        %p431 = pneg %p59
        %s432 = sld [smem:[#allocation8]]
        %s433 = sadd.s32 %s432, %s32
        %p434 = scmp.lt.s32.totalorder %s433, 2
        %s435 = scalar_select %p434, %s433, 2
        %p436 = scmp.lt.s32.totalorder %s34, 0
        %s437 = scalar_select %p436, %s34, 0
        %s438 = sadd.s32 %s437, %s435
        %s439 = smul.addr %s438, 8
        %s440 = scalar_lea.vmem %s2, %s439
        %p441 = pneg %p94
        %p442 = pneg %p91
        %p443 = pneg %p115
        %p444 = pneg %p112
        %p445 = pneg %p136
        %p446 = pneg %p133
        %p447 = pneg %p157
        %p448 = pneg %p154
        %p449 = pneg %p178
        %p450 = pneg %p175
        %p451 = pneg %p199
        %p452 = pneg %p196
        %p453 = pneg %p220
        %p454 = pneg %p217
        %p455 = pneg %p241
        %p456 = pneg %p238
        %p457 = pneg %p262
        %p458 = pneg %p259
        %p459 = pneg %p283
        %p460 = pneg %p280
        %p461 = pneg %p304
        %p462 = pneg %p301
        %s463 = sld [smem:[#allocation8]]
        %s464 = sadd.s32 %s463, %s32
        %p465 = scmp.lt.s32.totalorder %s464, 2
        %s466 = scalar_select %p465, %s464, 2
        %p467 = scmp.lt.s32.totalorder %s34, 0
        %s468 = scalar_select %p467, %s34, 0
        %s469 = sadd.s32 %s468, %s466
        %s470 = smul.addr %s469, 8
        %s471 = scalar_lea.vmem %s2, %s470
        %s472 = sld [smem:[#allocation8]]
        %s473 = sadd.s32 %s472, %s32
        %p474 = scmp.eq.s32.totalorder %s32, 0
        %p475 = scmp.eq.s32.totalorder %s33, 0
        %p476 = pnand %p474, %p475
        %p477 = pneg %p476
        // Predicated region
        $region81: #{tpu_custom_call.1} parent=63 // pred_check
          _
        $region82: #{tpu_custom_call.1} parent=63 // pred_check_branch
          %479 = sbr.rel (%p476) target = $region84
        $region83: #{tpu_custom_call.1} parent=63 // pred_region
          %v480 = vld [vmem:[#allocation9] sm:$0xff]
          %v481 = vld [vmem:[%s3] sm:$0xff]
          %v482 = vld [vmem:[%s3 + $0x8] sm:$0xff]
          %v483 = vld [vmem:[#allocation11] sm:$0x1]
          %v485 = vperm.slane %v483, 0
          %vm487 = vcmask 130048
          %v489 = vsel %vm487, %v480, 0
          %491 = vmatpush.msra.mxu0 0.0
          %492 = vmatpush.msra.mxu0 0.0
          %493 = vmatpush.msra.mxu0 0.0
          %494 = vmatpush.msra.mxu0 0.0
          %495 = vmatpush.msra.mxu0 0.0
          %496 = vmatpush.msra.mxu0 0.0
          %497 = vmatpush.msra.mxu0 0.0
          %498 = vmatpush.msra.mxu0 0.0
          %499 = vmatpush.msra.mxu0 0.0
          %500 = vmatpush.msra.mxu0 0.0
          %501 = vmatpush.msra.mxu0 0.0
          %502 = vmatpush.msra.mxu0 0.0
          %503 = vmatpush.msra.mxu0 0.0
          %504 = vmatpush.msra.mxu0 0.0
          %505 = vmatpush.msra.mxu0 %v482
          %506 = vmatpush.msra.mxu0 %v481
          %507 = vmatmul.f32.gmra.mxu0 %v489
          %v508 = vpop.f32.mrf.mxu0
          %v509 = vadd.f32 %v485, %v508
          %510 = vdwg.mxu0
          %vm511 = vcmask 261120
          %512 = vst.msk [vmem:[#allocation2] sm:$0xff] %vm511, %v509
          %vm513 = vcmask 7168
          %514 = vst.msk [vmem:[#allocation4] sm:$0xff] %vm513, -inf
          %515 = vst.msk [vmem:[#allocation5] sm:$0xff] %vm513, 0.0
          %516 = vst.msk [vmem:[#allocation6] sm:$0xff] %vm487, 0.0
        $region84: #{tpu_custom_call.1} parent=63 // pred_fallthru
          _
        %v517 = vld [vmem:[%s471] sm:$0xff]
        // Predicated region
        $region85: #{tpu_custom_call.1} parent=63 // pred_check
          %p518 = pneg %p475
        $region86: #{tpu_custom_call.1} parent=63 // pred_check_branch
          %520 = sbr.rel (%p518) target = $region88
        $region87: #{tpu_custom_call.1} parent=63 // pred_region
          %v521 = vld [vmem:[#allocation2] sm:$0xff]
          %vm522 = vcmask 64512
          %v524 = vsel %vm522, %v517, 0
          %526 = vmatpush.msra.mxu0 0.0
          %527 = vmatpush.msra.mxu0 0.0
          %528 = vmatpush.msra.mxu0 0.0
          %529 = vmatpush.msra.mxu0 0.0
          %530 = vmatpush.msra.mxu0 0.0
          %531 = vmatpush.msra.mxu0 0.0
          %532 = vmatpush.msra.mxu0 0.0
          %533 = vmatpush.msra.mxu0 0.0
          %534 = vmatpush.msra.mxu0 0.0
          %535 = vmatpush.msra.mxu0 0.0
          %536 = vmatpush.msra.mxu0 0.0
          %537 = vmatpush.msra.mxu0 0.0
          %538 = vmatpush.msra.mxu0 0.0
          %539 = vmatpush.msra.mxu0 0.0
          %540 = vmatpush.msra.mxu0 0.0
          %541 = vmatpush.msra.mxu0 %v521
          %542 = vmatmul.f32.gmra.mxu0 %v524
          %v543 = vpop.f32.mrf.mxu0
          %v544 = vadd.f32 0.0, %v543
          %545 = vdwg.mxu0
          %v546 = vmax.f32 %v544, 0.0
          %v547 = vld [vmem:[%s5] sm:$0xff]
          %v548 = vld [vmem:[%s5 + $0x8] sm:$0xff]
          %v549 = vld [vmem:[%s5 + $0x10] sm:$0xff]
          %v550 = vld [vmem:[%s5 + $0x18] sm:$0xff]
          %v551 = vld [vmem:[#allocation13] sm:$0x1]
          %v553 = vperm.slane %v551, 0
          %vm555 = vcmask 261120
          %v557 = vsel %vm555, %v546, 0
          %559 = vmatpush.msra.mxu0 0.0
          %560 = vmatpush.msra.mxu0 0.0
          %561 = vmatpush.msra.mxu0 0.0
          %562 = vmatpush.msra.mxu0 0.0
          %563 = vmatpush.msra.mxu0 0.0
          %564 = vmatpush.msra.mxu0 0.0
          %565 = vmatpush.msra.mxu0 0.0
          %566 = vmatpush.msra.mxu0 0.0
          %567 = vmatpush.msra.mxu0 0.0
          %568 = vmatpush.msra.mxu0 0.0
          %569 = vmatpush.msra.mxu0 0.0
          %570 = vmatpush.msra.mxu0 0.0
          %571 = vmatpush.msra.mxu0 %v550
          %572 = vmatpush.msra.mxu0 %v549
          %573 = vmatpush.msra.mxu0 %v548
          %574 = vmatpush.msra.mxu0 %v547
          %575 = vmatmul.f32.gmra.mxu0 %v557
          %v576 = vpop.f32.mrf.mxu0
          %v577 = vadd.f32 %v553, %v576
          %578 = vdwg.mxu0
          %vm579 = vcmask 130048
          %580 = vst.msk [vmem:[#allocation3] sm:$0xff] %vm579, %v577
        $region88: #{tpu_custom_call.1} parent=63 // pred_fallthru
          _
        %p581 = scmp.eq.s32.totalorder %s33, 1
        // Predicated region
        $region89: #{tpu_custom_call.1} parent=63 // pred_check
          %p582 = pneg %p581
        $region90: #{tpu_custom_call.1} parent=63 // pred_check_branch
          %584 = sbr.rel (%p582) target = $region92
        $region91: #{tpu_custom_call.1} parent=63 // pred_region
          %v585 = vld [vmem:[#allocation3] sm:$0xff]
          %vm586 = vcmask 64512
          %v588 = vsel %vm586, %v517, 0
          %590 = vmatpush.msra.mxu0 0.0
          %591 = vmatpush.msra.mxu0 0.0
          %592 = vmatpush.msra.mxu0 0.0
          %593 = vmatpush.msra.mxu0 0.0
          %594 = vmatpush.msra.mxu0 0.0
          %595 = vmatpush.msra.mxu0 0.0
          %596 = vmatpush.msra.mxu0 0.0
          %597 = vmatpush.msra.mxu0 0.0
          %598 = vmatpush.msra.mxu0 0.0
          %599 = vmatpush.msra.mxu0 0.0
          %600 = vmatpush.msra.mxu0 0.0
          %601 = vmatpush.msra.mxu0 0.0
          %602 = vmatpush.msra.mxu0 0.0
          %603 = vmatpush.msra.mxu0 0.0
          %604 = vmatpush.msra.mxu0 0.0
          %605 = vmatpush.msra.mxu0 %v585
          %606 = vmatmul.f32.gmra.mxu0 %v588
          %v607 = vpop.f32.mrf.mxu0
          %v608 = vadd.f32 0.0, %v607
          %609 = vdwg.mxu0
          %v610 = vld [vmem:[%s7] sm:$0xff]
          %v611 = vld [vmem:[%s7 + $0x8] sm:$0xff]
          %v612 = vld [vmem:[#allocation14] sm:$0x1]
          %v614 = vperm.slane %v612, 0
          %vm616 = vcmask 130048
          %v618 = vsel %vm616, %v608, 0
          %620 = vmatpush.msra.mxu0 0.0
          %621 = vmatpush.msra.mxu0 0.0
          %622 = vmatpush.msra.mxu0 0.0
          %623 = vmatpush.msra.mxu0 0.0
          %624 = vmatpush.msra.mxu0 0.0
          %625 = vmatpush.msra.mxu0 0.0
          %626 = vmatpush.msra.mxu0 0.0
          %627 = vmatpush.msra.mxu0 0.0
          %628 = vmatpush.msra.mxu0 0.0
          %629 = vmatpush.msra.mxu0 0.0
          %630 = vmatpush.msra.mxu0 0.0
          %631 = vmatpush.msra.mxu0 0.0
          %632 = vmatpush.msra.mxu0 0.0
          %633 = vmatpush.msra.mxu0 0.0
          %634 = vmatpush.msra.mxu0 %v611
          %635 = vmatpush.msra.mxu0 %v610
          %636 = vmatmul.f32.gmra.mxu0 %v618
          %v637 = vpop.f32.mrf.mxu0
          %v638 = vadd.f32 %v614, %v637
          %639 = vdwg.mxu0
          %v640 = vtanh.pop %v638
          %v641 = vld [vmem:[%s9] sm:$0x1]
          %v643 = vperm.slane %v641, 0
          %v645 = vmul.f32 %v640, %v643
          %v646 = vsel %vm616, %v645, 0.0
          %647 = vadd.xlane.f32.xlu0 %v646
          %v648 = vpop.xlane.xlu0 %647
          %v649 = vld [vmem:[#allocation4] sm:$0xff]
          %v650 = vmax.f32 %v649, %v648
          %v651 = vsub.f32 %v649, %v650
          %v652 = vmul.f32 %v651, 1.442695
          %v653 = vpow.pop %v652
          %v654 = vsub.f32 %v648, %v650
          %v655 = vmul.f32 %v654, 1.442695
          %v656 = vpow.pop %v655
          %v657 = vld [vmem:[#allocation5] sm:$0xff]
          %v658 = vmul.f32 %v653, %v657
          %v659 = vadd.f32 %v658, %v656
          %vm660 = vcmask 7168
          %661 = vst.msk [vmem:[#allocation5] sm:$0xff] %vm660, %v659
          %v662 = vld [vmem:[#allocation6] sm:$0xff]
          %664 = vset.pattern.permute.xlu0 0
          %665 = vperm.xlu0 %664, %v653
          %v666 = vpop.permute.xlu0 %665
          %v668 = vmul.f32 %v666, %v662
          %670 = vset.pattern.permute.xlu0 0
          %671 = vperm.xlu0 %670, %v656
          %v672 = vpop.permute.xlu0 %671
          %v674 = vmul.f32 %v672, %v608
          %v675 = vadd.f32 %v668, %v674
          %676 = vst.msk [vmem:[#allocation6] sm:$0xff] %vm616, %v675
          %677 = vst.msk [vmem:[#allocation4] sm:$0xff] %vm660, %v650
        $region92: #{tpu_custom_call.1} parent=63 // pred_fallthru
          _
        %p678 = scmp.eq.s32.totalorder %s32, 1
        %p679 = pnand %p581, %p678
        %p680 = pneg %p679
        // Predicated region
        $region93: #{tpu_custom_call.1} parent=63 // pred_check
          _
        $region94: #{tpu_custom_call.1} parent=63 // pred_check_branch
          %682 = sbr.rel (%p679) target = $region96
        $region95: #{tpu_custom_call.1} parent=63 // pred_region
          %v683 = vld [vmem:[#allocation6] sm:$0xff]
          %v684 = vld [vmem:[#allocation5] sm:$0xff]
          %v685 = vrcp.pop %v684
          %v686 = vmul.f32 %v684, %v685
          %v687 = vsub.f32 1.0, %v686
          %v688 = vmul.f32 %v685, %v687
          %v689 = vadd.f32 %v685, %v688
          %vm690 = vweird.f32 %v684
          %vm691 = vweird.f32 %v685
          %vm692 = vmor %vm690, %vm691
          %v693 = vsel %vm692, %v685, %v689
          %v694 = vand.u32 2147483647, %v684
          %vm695 = vcmp.eq.f32.partialorder %v694, 8.507059e+37
          %v696 = vand.u32 %v684, 2147483648
          %v697 = vor.u32 1.1754944e-38, %v696
          %v698 = vsel %vm695, %v697, %v693
          %700 = vset.pattern.permute.xlu0 0
          %701 = vperm.xlu0 %700, %v698
          %v702 = vpop.permute.xlu0 %701
          %v704 = vmul.f32 %v683, %v702
          %v705 = vld [vmem:[%s10] sm:$0xff]
          %v706 = vld [vmem:[%s10 + $0x8] sm:$0xff]
          %v707 = vld [vmem:[%s11] sm:$0x1]
          %v709 = vperm.slane %v707, 0
          %vm711 = vcmask 130048
          %v713 = vsel %vm711, %v704, 0
          %715 = vmatpush.msra.mxu0 0.0
          %716 = vmatpush.msra.mxu0 0.0
          %717 = vmatpush.msra.mxu0 0.0
          %718 = vmatpush.msra.mxu0 0.0
          %719 = vmatpush.msra.mxu0 0.0
          %720 = vmatpush.msra.mxu0 0.0
          %721 = vmatpush.msra.mxu0 0.0
          %722 = vmatpush.msra.mxu0 0.0
          %723 = vmatpush.msra.mxu0 0.0
          %724 = vmatpush.msra.mxu0 0.0
          %725 = vmatpush.msra.mxu0 0.0
          %726 = vmatpush.msra.mxu0 0.0
          %727 = vmatpush.msra.mxu0 0.0
          %728 = vmatpush.msra.mxu0 0.0
          %729 = vmatpush.msra.mxu0 %v706
          %730 = vmatpush.msra.mxu0 %v705
          %731 = vmatmul.f32.gmra.mxu0 %v713
          %v732 = vpop.f32.mrf.mxu0
          %v733 = vadd.f32 %v709, %v732
          %734 = vdwg.mxu0
          %vm735 = vcmask 31744
          %v736 = vsel %vm735, %v733, -inf
          %737 = vmax.xlane.f32.xlu0 %v736
          %v738 = vpop.xlane.xlu0 %737
          %v739 = vsub.f32 %v733, %v738
          %v740 = vmul.f32 %v739, 1.442695
          %v741 = vpow.pop %v740
          %v742 = vsel %vm735, %v741, 0.0
          %743 = vadd.xlane.f32.xlu0 %v742
          %v744 = vpop.xlane.xlu0 %743
          %v745 = vlog2.pop %v744
          %v746 = vmul.f32 %v745, 0.6931472
          %v747 = vadd.f32 %v746, %v738
          %v748 = vsub.f32 %v733, %v747
          %749 = vst.msk [vmem:[%s12] sm:$0xff] %vm735, %v748
        $region96: #{tpu_custom_call.1} parent=63 // pred_fallthru
          _
        // Predicated region
        $region97: #{tpu_custom_call.1} parent=63 // pred_check
          %p750 = pneg %p301
        $region98: #{tpu_custom_call.1} parent=63 // pred_check_branch
          %752 = sbr.rel (%p750) target = $region100
        $region99: #{tpu_custom_call.1} parent=63 // pred_region
          _
        $region100: #{tpu_custom_call.1} parent=63 // pred_fallthru
          _
        // Predicated region
        $region101: #{tpu_custom_call.1} parent=63 // pred_check
          %p753 = pneg %p301
        $region102: #{tpu_custom_call.1} parent=63 // pred_check_branch
          %755 = sbr.rel (%p753) target = $region104
        $region103: #{tpu_custom_call.1} parent=63 // pred_region
          _
        $region104: #{tpu_custom_call.1} parent=63 // pred_fallthru
          _
      $region64: #{tpu_custom_call.1} parent=5 // pred_fallthru
        _
      %p756 = scmp.le.s32.totalorder 2, %s22
      // Predicated region
      $region105: #{tpu_custom_call.1} parent=5 // pred_check
        %p757 = pneg %p756
      $region106: #{tpu_custom_call.1} parent=5 // pred_check_branch
        %759 = sbr.rel (%p757) target = $region108
      $region107: #{tpu_custom_call.1} parent=5 // pred_region
        %s760 = ssub.s32 %s22, 2
      $region108: #{tpu_custom_call.1} parent=5 // pred_fallthru
        _
    $region6: #{tpu_custom_call.1} parent=1 // loop_footer
      %s26 = sadd.s32 1, %s22
    $region7: #{tpu_custom_call.1} parent=1 // loop_footer_branch
      %21 = sbr.rel target = $region3
    $region8: #{tpu_custom_call.1} parent=1 // loop_exit
      _
    %761 = vsyncpa [#allocation10], 1
    %s762 = scalar_lea.sflag [#allocation10], 1
    %763 = vsyncpa %s762, 1
    %764 = vsyncpa [#allocation12], 1
    %765 = vsyncpa [#allocation15], 1

// kernel: tpu_custom_call.1
$region0: #{tpu_custom_call.1}
  #allocation0 [shape = 'u32[]', space=smem, size = 0x4, offset = 0x4, fixed_abs, tag = 'smem constant byte address 0x4 - core index']
  #allocation1 [shape = 'u32[72,128]{1,0:T(1,128)}', space=vmem, size = 0x9000, scoped, tag = 'internal scratch']
  #allocation2 [shape = 'f32[8,32]{1,0:T(8,128)}', space=vmem, size = 0x1000, scoped, tag = 'scratch operand']
  #allocation3 [shape = 'f32[8,16]{1,0:T(8,128)}', space=vmem, size = 0x1000, scoped, tag = 'scratch operand']
  #allocation4 [shape = 'f32[8,1]{1,0:T(8,128)}', space=vmem, size = 0x1000, scoped, tag = 'scratch operand']
  #allocation5 [shape = 'f32[8,1]{1,0:T(8,128)}', space=vmem, size = 0x1000, scoped, tag = 'scratch operand']
  #allocation6 [shape = 'f32[8,16]{1,0:T(8,128)}', space=vmem, size = 0x1000, scoped, tag = 'scratch operand']
  #allocation7 [shape = 's32[1]{0}', space=sflag, size = 0x4, scoped, tag = 'scoped memory for tpu_custom_call.1']
  #allocation8 [shape = 's32[1]{0:T(128)S(6)}', space=smem, size = 0x200, scoped, tag = 'prefetched SMEM operand 0']
  %s0 = inlined_call_operand.<no memory space> [shape: s32[1], index: 0, kind: input, shape index: {}]
  %s1 = inlined_call_operand.hbm [shape: f32[8,16], index: 1, kind: input, shape index: {}]
  %s2 = inlined_call_operand.vmem [shape: f32[3,8,8], index: 2, kind: input, shape index: {}]
  %s3 = inlined_call_operand.vmem [shape: f32[16,32], index: 3, kind: input, shape index: {}]
  %s4 = inlined_call_operand.hbm [shape: f32[1,32], index: 4, kind: input, shape index: {}]
  %s5 = inlined_call_operand.vmem [shape: f32[32,16], index: 5, kind: input, shape index: {}]
  %s6 = inlined_call_operand.hbm [shape: f32[1,16], index: 6, kind: input, shape index: {}]
  %s7 = inlined_call_operand.vmem [shape: f32[16,16], index: 7, kind: input, shape index: {}]
  %s8 = inlined_call_operand.hbm [shape: f32[1,16], index: 8, kind: input, shape index: {}]
  %s9 = inlined_call_operand.vmem [shape: f32[1,16], index: 9, kind: input, shape index: {}]
  %s10 = inlined_call_operand.vmem [shape: f32[16,4], index: 10, kind: input, shape index: {}]
  %s11 = inlined_call_operand.vmem [shape: f32[1,4], index: 11, kind: input, shape index: {}]
  %s12 = inlined_call_operand.vmem [shape: f32[8,4], index: 12, kind: output, shape index: {}]
  %s13 = sld [smem:[#allocation0]]
  $region109: #{tpu_custom_call.1} parent=0
    _
  %s15 = ssub.s32 1, %s13
  %s16 = scalar_select 0, %s15, %s13
  %17 = sst [smem:[#allocation8]] %s0
  $region1: #{tpu_custom_call.1} parent=0
    #allocation9 [shape = 'u8[4096]{0}', space=vmem, size = 0x1000, scoped, tag = 'input window, operand 1, single buffered']
    #allocation10 [shape = 's32[2]{0}', space=sflag, size = 0x8, scoped, tag = 'scoped memory for tpu_custom_call.1']
    #allocation11 [shape = 'u8[512]{0}', space=vmem, size = 0x400, scoped, tag = 'input window, operand 4, single buffered']
    #allocation12 [shape = 's32[1]{0}', space=sflag, size = 0x4, scoped, tag = 'scoped memory for tpu_custom_call.1']
    #allocation13 [shape = 'u8[512]{0}', space=vmem, size = 0x400, scoped, tag = 'input window, operand 6, single buffered']
    #allocation14 [shape = 'u8[512]{0}', space=vmem, size = 0x400, scoped, tag = 'input window, operand 8, single buffered']
    #allocation15 [shape = 's32[1]{0}', space=sflag, size = 0x4, scoped, tag = 'scoped memory for tpu_custom_call.1']
    %18 = vsyncpa [#allocation10], 0
    %19 = vsyncpa [#allocation12], 0
    %20 = vsyncpa [#allocation15], 0
    loop: start=0, step=1, limit=6
    $region2: #{tpu_custom_call.1} parent=1 // loop_pre_header
      _
    $region3: #{tpu_custom_call.1} parent=1 // loop_header
      %s22 = sphi 0, %s26
      %p23 = scmp.ge.s32.totalorder %s22, 6
      %s29 = sphi 0, %s48
      %s30 = sphi 0, %s44
      %s31 = sphi 0, %s40
      %s32 = sphi 0, %s29
      %s33 = sphi 0, %s30
      %s34 = sphi 0, %s31
      %s35 = sphi 0, %s32
      %s36 = sphi 0, %s33
      %s37 = sphi 0, %s34
      %s49 = sphi 0, %s49
      %s51 = sphi 0, %s49
      %s52 = sphi 0, %s51
      %s66 = sphi 0, %s52
      %s78 = sphi 0, %s80
      %s81 = sphi 0, %s78
      %s82 = sphi 0, %s81
      %s98 = sphi 0, %s82
      %s102 = sphi 0, %s102
      %s104 = sphi 0, %s102
      %s105 = sphi 0, %s104
      %s119 = sphi 0, %s105
      %s123 = sphi 0, %s123
      %s125 = sphi 0, %s123
      %s126 = sphi 0, %s125
      %s140 = sphi 0, %s126
      %s144 = sphi 0, %s144
      %s146 = sphi 0, %s144
      %s147 = sphi 0, %s146
      %s161 = sphi 0, %s147
      %s165 = sphi 0, %s165
      %s167 = sphi 0, %s165
      %s168 = sphi 0, %s167
      %s182 = sphi 0, %s168
      %s186 = sphi 0, %s186
      %s188 = sphi 0, %s186
      %s189 = sphi 0, %s188
      %s203 = sphi 0, %s189
      %s207 = sphi 0, %s207
      %s209 = sphi 0, %s207
      %s210 = sphi 0, %s209
      %s224 = sphi 0, %s210
      %s228 = sphi 0, %s228
      %s230 = sphi 0, %s228
      %s231 = sphi 0, %s230
      %s245 = sphi 0, %s231
      %s249 = sphi 0, %s249
      %s251 = sphi 0, %s249
      %s252 = sphi 0, %s251
      %s266 = sphi 0, %s252
      %s270 = sphi 0, %s270
      %s272 = sphi 0, %s270
      %s273 = sphi 0, %s272
      %s287 = sphi 0, %s273
      %s291 = sphi 0, %s291
      %s293 = sphi 0, %s291
      %s294 = sphi 0, %s293
      %s308 = sphi 0, %s294
    $region4: #{tpu_custom_call.1} parent=1 // loop_header_branch
      %25 = sbr.rel (%p23) target = $region8
    $region5: #{tpu_custom_call.1} parent=1 // loop_body
      %s27 = ssub.s32 %s22, 1
      %s28 = ssub.s32 %s22, 2
      %s38 = sadd.s32 1, %s31
      %p39 = scmp.ge.s32.totalorder %s38, 1
      %s40 = scalar_select %p39, 0, %s38
      %s41 = sadd.s32 1, %s30
      %s42 = scalar_select %p39, %s41, %s30
      %p43 = scmp.ge.s32.totalorder %s42, 2
      %s44 = scalar_select %p43, 0, %s42
      %s45 = sadd.s32 1, %s29
      %s46 = scalar_select %p43, %s45, %s29
      %p47 = scmp.ge.s32.totalorder %s46, 2
      %s48 = scalar_select %p47, 0, %s46
      %s50 = sadd.s32 %s49, 1
      %p53 = scmp.eq.s32.totalorder %s22, 3
      %p54 = scmp.ne.s32.totalorder %s49, %s51
      %p55 = scmp.eq.s32.totalorder %s22, 0
      %p56 = por %p54, %p55
      %p57 = scmp.ne.s32.totalorder %s49, %s51
      %p58 = scmp.eq.s32.totalorder %s27, 3
      %p59 = por %p57, %p58
      %p60 = scmp.ne.s32.totalorder %s51, %s52
      %p61 = scmp.eq.s32.totalorder %s27, 0
      %p62 = por %p60, %p61
      %p63 = scmp.ne.s32.totalorder %s51, %s52
      %p64 = scmp.eq.s32.totalorder %s28, 3
      %p65 = por %p63, %p64
      %p67 = scmp.ne.s32.totalorder %s52, %s66
      %p68 = scmp.eq.s32.totalorder %s28, 0
      %p69 = por %p67, %p68
      %s70 = sld [smem:[#allocation8]]
      %s71 = sadd.s32 %s70, %s29
      %s72 = sld [smem:[#allocation8]]
      %s73 = sadd.s32 %s72, %s48
      %s74 = ssub.s32 %s71, %s73
      %s75 = ssub.s32 %s31, %s40
      %s76 = sor.u32 %s74, %s75
      %p77 = scmp.eq.s32.totalorder %s76, 0
      %s79 = sadd.s32 %s78, 1
      %s80 = scalar_select %p77, %s78, %s79
      %p83 = pneg %p77
      %p84 = scmp.eq.s32.totalorder %s22, 3
      %p85 = por %p83, %p84
      %p86 = scmp.ne.s32.totalorder %s78, %s81
      %p87 = scmp.eq.s32.totalorder %s22, 0
      %p88 = por %p86, %p87
      %p89 = scmp.ne.s32.totalorder %s78, %s81
      %p90 = scmp.eq.s32.totalorder %s27, 3
      %p91 = por %p89, %p90
      %p92 = scmp.ne.s32.totalorder %s81, %s82
      %p93 = scmp.eq.s32.totalorder %s27, 0
      %p94 = por %p92, %p93
      %p95 = scmp.ne.s32.totalorder %s81, %s82
      %p96 = scmp.eq.s32.totalorder %s28, 3
      %p97 = por %p95, %p96
      %p99 = scmp.ne.s32.totalorder %s82, %s98
      %p100 = scmp.eq.s32.totalorder %s28, 0
      %p101 = por %p99, %p100
      %s103 = sadd.s32 %s102, 1
      %p106 = scmp.eq.s32.totalorder %s22, 3
      %p107 = scmp.ne.s32.totalorder %s102, %s104
      %p108 = scmp.eq.s32.totalorder %s22, 0
      %p109 = por %p107, %p108
      %p110 = scmp.ne.s32.totalorder %s102, %s104
      %p111 = scmp.eq.s32.totalorder %s27, 3
      %p112 = por %p110, %p111
      %p113 = scmp.ne.s32.totalorder %s104, %s105
      %p114 = scmp.eq.s32.totalorder %s27, 0
      %p115 = por %p113, %p114
      %p116 = scmp.ne.s32.totalorder %s104, %s105
      %p117 = scmp.eq.s32.totalorder %s28, 3
      %p118 = por %p116, %p117
      %p120 = scmp.ne.s32.totalorder %s105, %s119
      %p121 = scmp.eq.s32.totalorder %s28, 0
      %p122 = por %p120, %p121
      %s124 = sadd.s32 %s123, 1
      %p127 = scmp.eq.s32.totalorder %s22, 3
      %p128 = scmp.ne.s32.totalorder %s123, %s125
      %p129 = scmp.eq.s32.totalorder %s22, 0
      %p130 = por %p128, %p129
      %p131 = scmp.ne.s32.totalorder %s123, %s125
      %p132 = scmp.eq.s32.totalorder %s27, 3
      %p133 = por %p131, %p132
      %p134 = scmp.ne.s32.totalorder %s125, %s126
      %p135 = scmp.eq.s32.totalorder %s27, 0
      %p136 = por %p134, %p135
      %p137 = scmp.ne.s32.totalorder %s125, %s126
      %p138 = scmp.eq.s32.totalorder %s28, 3
      %p139 = por %p137, %p138
      %p141 = scmp.ne.s32.totalorder %s126, %s140
      %p142 = scmp.eq.s32.totalorder %s28, 0
      %p143 = por %p141, %p142
      %s145 = sadd.s32 %s144, 1
      %p148 = scmp.eq.s32.totalorder %s22, 3
      %p149 = scmp.ne.s32.totalorder %s144, %s146
      %p150 = scmp.eq.s32.totalorder %s22, 0
      %p151 = por %p149, %p150
      %p152 = scmp.ne.s32.totalorder %s144, %s146
      %p153 = scmp.eq.s32.totalorder %s27, 3
      %p154 = por %p152, %p153
      %p155 = scmp.ne.s32.totalorder %s146, %s147
      %p156 = scmp.eq.s32.totalorder %s27, 0
      %p157 = por %p155, %p156
      %p158 = scmp.ne.s32.totalorder %s146, %s147
      %p159 = scmp.eq.s32.totalorder %s28, 3
      %p160 = por %p158, %p159
      %p162 = scmp.ne.s32.totalorder %s147, %s161
      %p163 = scmp.eq.s32.totalorder %s28, 0
      %p164 = por %p162, %p163
      %s166 = sadd.s32 %s165, 1
      %p169 = scmp.eq.s32.totalorder %s22, 3
      %p170 = scmp.ne.s32.totalorder %s165, %s167
      %p171 = scmp.eq.s32.totalorder %s22, 0
      %p172 = por %p170, %p171
      %p173 = scmp.ne.s32.totalorder %s165, %s167
      %p174 = scmp.eq.s32.totalorder %s27, 3
      %p175 = por %p173, %p174
      %p176 = scmp.ne.s32.totalorder %s167, %s168
      %p177 = scmp.eq.s32.totalorder %s27, 0
      %p178 = por %p176, %p177
      %p179 = scmp.ne.s32.totalorder %s167, %s168
      %p180 = scmp.eq.s32.totalorder %s28, 3
      %p181 = por %p179, %p180
      %p183 = scmp.ne.s32.totalorder %s168, %s182
      %p184 = scmp.eq.s32.totalorder %s28, 0
      %p185 = por %p183, %p184
      %s187 = sadd.s32 %s186, 1
      %p190 = scmp.eq.s32.totalorder %s22, 3
      %p191 = scmp.ne.s32.totalorder %s186, %s188
      %p192 = scmp.eq.s32.totalorder %s22, 0
      %p193 = por %p191, %p192
      %p194 = scmp.ne.s32.totalorder %s186, %s188
      %p195 = scmp.eq.s32.totalorder %s27, 3
      %p196 = por %p194, %p195
      %p197 = scmp.ne.s32.totalorder %s188, %s189
      %p198 = scmp.eq.s32.totalorder %s27, 0
      %p199 = por %p197, %p198
      %p200 = scmp.ne.s32.totalorder %s188, %s189
      %p201 = scmp.eq.s32.totalorder %s28, 3
      %p202 = por %p200, %p201
      %p204 = scmp.ne.s32.totalorder %s189, %s203
      %p205 = scmp.eq.s32.totalorder %s28, 0
      %p206 = por %p204, %p205
      %s208 = sadd.s32 %s207, 1
      %p211 = scmp.eq.s32.totalorder %s22, 3
      %p212 = scmp.ne.s32.totalorder %s207, %s209
      %p213 = scmp.eq.s32.totalorder %s22, 0
      %p214 = por %p212, %p213
      %p215 = scmp.ne.s32.totalorder %s207, %s209
      %p216 = scmp.eq.s32.totalorder %s27, 3
      %p217 = por %p215, %p216
      %p218 = scmp.ne.s32.totalorder %s209, %s210
      %p219 = scmp.eq.s32.totalorder %s27, 0
      %p220 = por %p218, %p219
      %p221 = scmp.ne.s32.totalorder %s209, %s210
      %p222 = scmp.eq.s32.totalorder %s28, 3
      %p223 = por %p221, %p222
      %p225 = scmp.ne.s32.totalorder %s210, %s224
      %p226 = scmp.eq.s32.totalorder %s28, 0
      %p227 = por %p225, %p226
      %s229 = sadd.s32 %s228, 1
      %p232 = scmp.eq.s32.totalorder %s22, 3
      %p233 = scmp.ne.s32.totalorder %s228, %s230
      %p234 = scmp.eq.s32.totalorder %s22, 0
      %p235 = por %p233, %p234
      %p236 = scmp.ne.s32.totalorder %s228, %s230
      %p237 = scmp.eq.s32.totalorder %s27, 3
      %p238 = por %p236, %p237
      %p239 = scmp.ne.s32.totalorder %s230, %s231
      %p240 = scmp.eq.s32.totalorder %s27, 0
      %p241 = por %p239, %p240
      %p242 = scmp.ne.s32.totalorder %s230, %s231
      %p243 = scmp.eq.s32.totalorder %s28, 3
      %p244 = por %p242, %p243
      %p246 = scmp.ne.s32.totalorder %s231, %s245
      %p247 = scmp.eq.s32.totalorder %s28, 0
      %p248 = por %p246, %p247
      %s250 = sadd.s32 %s249, 1
      %p253 = scmp.eq.s32.totalorder %s22, 3
      %p254 = scmp.ne.s32.totalorder %s249, %s251
      %p255 = scmp.eq.s32.totalorder %s22, 0
      %p256 = por %p254, %p255
      %p257 = scmp.ne.s32.totalorder %s249, %s251
      %p258 = scmp.eq.s32.totalorder %s27, 3
      %p259 = por %p257, %p258
      %p260 = scmp.ne.s32.totalorder %s251, %s252
      %p261 = scmp.eq.s32.totalorder %s27, 0
      %p262 = por %p260, %p261
      %p263 = scmp.ne.s32.totalorder %s251, %s252
      %p264 = scmp.eq.s32.totalorder %s28, 3
      %p265 = por %p263, %p264
      %p267 = scmp.ne.s32.totalorder %s252, %s266
      %p268 = scmp.eq.s32.totalorder %s28, 0
      %p269 = por %p267, %p268
      %s271 = sadd.s32 %s270, 1
      %p274 = scmp.eq.s32.totalorder %s22, 3
      %p275 = scmp.ne.s32.totalorder %s270, %s272
      %p276 = scmp.eq.s32.totalorder %s22, 0
      %p277 = por %p275, %p276
      %p278 = scmp.ne.s32.totalorder %s270, %s272
      %p279 = scmp.eq.s32.totalorder %s27, 3
      %p280 = por %p278, %p279
      %p281 = scmp.ne.s32.totalorder %s272, %s273
      %p282 = scmp.eq.s32.totalorder %s27, 0
      %p283 = por %p281, %p282
      %p284 = scmp.ne.s32.totalorder %s272, %s273
      %p285 = scmp.eq.s32.totalorder %s28, 3
      %p286 = por %p284, %p285
      %p288 = scmp.ne.s32.totalorder %s273, %s287
      %p289 = scmp.eq.s32.totalorder %s28, 0
      %p290 = por %p288, %p289
      %s292 = sadd.s32 %s291, 1
      %p295 = scmp.eq.s32.totalorder %s22, 3
      %p296 = scmp.ne.s32.totalorder %s291, %s293
      %p297 = scmp.eq.s32.totalorder %s22, 0
      %p298 = por %p296, %p297
      %p299 = scmp.ne.s32.totalorder %s291, %s293
      %p300 = scmp.eq.s32.totalorder %s27, 3
      %p301 = por %p299, %p300
      %p302 = scmp.ne.s32.totalorder %s293, %s294
      %p303 = scmp.eq.s32.totalorder %s27, 0
      %p304 = por %p302, %p303
      %p305 = scmp.ne.s32.totalorder %s293, %s294
      %p306 = scmp.eq.s32.totalorder %s28, 3
      %p307 = por %p305, %p306
      %p309 = scmp.ne.s32.totalorder %s294, %s308
      %p310 = scmp.eq.s32.totalorder %s28, 0
      %p311 = por %p309, %p310
      %p312 = scmp.le.s32.totalorder 1, %s22
      %p313 = scmp.lt.s32.totalorder %s22, 5
      %p314 = pnand %p312, %p313
      %p315 = pneg %p314
      // Predicated region
      $region9: #{tpu_custom_call.1} parent=5 // pred_check
        _
      $region10: #{tpu_custom_call.1} parent=5 // pred_check_branch
        %317 = sbr.rel (%p314) target = $region12
      $region11: #{tpu_custom_call.1} parent=5 // pred_region
        %s318 = ssub.s32 %s22, 1
        // Predicated region
        $region13: #{tpu_custom_call.1} parent=11 // pred_check
          %p319 = pneg %p62
        $region14: #{tpu_custom_call.1} parent=11 // pred_check_branch
          %321 = sbr.rel (%p319) target = $region16
        $region15: #{tpu_custom_call.1} parent=11 // pred_region
          %323 = vsyncadd [#allocation10], 0
          %s325 = sshll.u32 %s1, 4
          %s326 = int_to_ptr.hbm [resolvable:$true] %s325
          %s327 = sshll.u32 [#allocation9], 4
          %s328 = int_to_ptr.vmem [resolvable:$true] %s327
          %330 = dma.hbm_to_vmem [thread:$0]  %s326, 128, %s328, [#allocation10]
        $region16: #{tpu_custom_call.1} parent=11 // pred_fallthru
          _
        // Predicated region
        $region17: #{tpu_custom_call.1} parent=11 // pred_check
          %p331 = pneg %p115
        $region18: #{tpu_custom_call.1} parent=11 // pred_check_branch
          %333 = sbr.rel (%p331) target = $region20
        $region19: #{tpu_custom_call.1} parent=11 // pred_region
          _
        $region20: #{tpu_custom_call.1} parent=11 // pred_fallthru
          _
        // Predicated region
        $region21: #{tpu_custom_call.1} parent=11 // pred_check
          %p334 = pneg %p136
        $region22: #{tpu_custom_call.1} parent=11 // pred_check_branch
          %336 = sbr.rel (%p334) target = $region24
        $region23: #{tpu_custom_call.1} parent=11 // pred_region
          %338 = vsyncadd [#allocation12], 0
          %s340 = sshll.u32 %s4, 4
          %s341 = int_to_ptr.hbm [resolvable:$true] %s340
          %s342 = sshll.u32 [#allocation11], 4
          %s343 = int_to_ptr.vmem [resolvable:$true] %s342
          %345 = dma.hbm_to_vmem [thread:$0]  %s341, 16, %s343, [#allocation12]
        $region24: #{tpu_custom_call.1} parent=11 // pred_fallthru
          _
        // Predicated region
        $region25: #{tpu_custom_call.1} parent=11 // pred_check
          %p346 = pneg %p157
        $region26: #{tpu_custom_call.1} parent=11 // pred_check_branch
          %348 = sbr.rel (%p346) target = $region28
        $region27: #{tpu_custom_call.1} parent=11 // pred_region
          _
        $region28: #{tpu_custom_call.1} parent=11 // pred_fallthru
          _
        // Predicated region
        $region29: #{tpu_custom_call.1} parent=11 // pred_check
          %p349 = pneg %p178
        $region30: #{tpu_custom_call.1} parent=11 // pred_check_branch
          %351 = sbr.rel (%p349) target = $region32
        $region31: #{tpu_custom_call.1} parent=11 // pred_region
          %353 = vsyncadd [#allocation12], 0
          %s355 = sshll.u32 %s6, 4
          %s356 = int_to_ptr.hbm [resolvable:$true] %s355
          %s357 = sshll.u32 [#allocation13], 4
          %s358 = int_to_ptr.vmem [resolvable:$true] %s357
          %360 = dma.hbm_to_vmem [thread:$0]  %s356, 16, %s358, [#allocation12]
        $region32: #{tpu_custom_call.1} parent=11 // pred_fallthru
          _
        // Predicated region
        $region33: #{tpu_custom_call.1} parent=11 // pred_check
          %p361 = pneg %p199
        $region34: #{tpu_custom_call.1} parent=11 // pred_check_branch
          %363 = sbr.rel (%p361) target = $region36
        $region35: #{tpu_custom_call.1} parent=11 // pred_region
          _
        $region36: #{tpu_custom_call.1} parent=11 // pred_fallthru
          _
        // Predicated region
        $region37: #{tpu_custom_call.1} parent=11 // pred_check
          %p364 = pneg %p220
        $region38: #{tpu_custom_call.1} parent=11 // pred_check_branch
          %366 = sbr.rel (%p364) target = $region40
        $region39: #{tpu_custom_call.1} parent=11 // pred_region
          %368 = vsyncadd [#allocation15], 0
          %s370 = sshll.u32 %s8, 4
          %s371 = int_to_ptr.hbm [resolvable:$true] %s370
          %s372 = sshll.u32 [#allocation14], 4
          %s373 = int_to_ptr.vmem [resolvable:$true] %s372
          %375 = dma.hbm_to_vmem [thread:$0]  %s371, 16, %s373, [#allocation15]
        $region40: #{tpu_custom_call.1} parent=11 // pred_fallthru
          _
        // Predicated region
        $region41: #{tpu_custom_call.1} parent=11 // pred_check
          %p376 = pneg %p241
        $region42: #{tpu_custom_call.1} parent=11 // pred_check_branch
          %378 = sbr.rel (%p376) target = $region44
        $region43: #{tpu_custom_call.1} parent=11 // pred_region
          _
        $region44: #{tpu_custom_call.1} parent=11 // pred_fallthru
          _
        // Predicated region
        $region45: #{tpu_custom_call.1} parent=11 // pred_check
          %p379 = pneg %p262
        $region46: #{tpu_custom_call.1} parent=11 // pred_check_branch
          %381 = sbr.rel (%p379) target = $region48
        $region47: #{tpu_custom_call.1} parent=11 // pred_region
          _
        $region48: #{tpu_custom_call.1} parent=11 // pred_fallthru
          _
        // Predicated region
        $region49: #{tpu_custom_call.1} parent=11 // pred_check
          %p382 = pneg %p283
        $region50: #{tpu_custom_call.1} parent=11 // pred_check_branch
          %384 = sbr.rel (%p382) target = $region52
        $region51: #{tpu_custom_call.1} parent=11 // pred_region
          _
        $region52: #{tpu_custom_call.1} parent=11 // pred_fallthru
          _
      $region12: #{tpu_custom_call.1} parent=5 // pred_fallthru
        _
      %p385 = scmp.lt.s32.totalorder %s22, 4
      // Predicated region
      $region53: #{tpu_custom_call.1} parent=5 // pred_check
        %p386 = pneg %p385
      $region54: #{tpu_custom_call.1} parent=5 // pred_check_branch
        %388 = sbr.rel (%p386) target = $region56
      $region55: #{tpu_custom_call.1} parent=5 // pred_region
        // Predicated region
        $region57: #{tpu_custom_call.1} parent=55 // pred_check
          %p389 = pneg %p88
        $region58: #{tpu_custom_call.1} parent=55 // pred_check_branch
          %391 = sbr.rel (%p389) target = $region60
        $region59: #{tpu_custom_call.1} parent=55 // pred_region
          %s392 = sld [smem:[#allocation8]]
          %s393 = sadd.s32 %s392, %s29
          %p394 = scmp.lt.s32.totalorder %s393, 2
          %s395 = scalar_select %p394, %s393, 2
          %p396 = scmp.lt.s32.totalorder %s31, 0
          %s397 = scalar_select %p396, %s31, 0
          %s398 = sadd.s32 %s397, %s395
          %s399 = smul.addr %s398, 8
          %s400 = scalar_lea.vmem %s2, %s399
          %s401 = sld [smem:[#allocation8]]
          %s402 = sadd.s32 %s401, %s29
        $region60: #{tpu_custom_call.1} parent=55 // pred_fallthru
          _
      $region56: #{tpu_custom_call.1} parent=5 // pred_fallthru
        _
      %p403 = scmp.le.s32.totalorder 1, %s22
      %p404 = scmp.lt.s32.totalorder %s22, 5
      %p405 = pnand %p403, %p404
      %p406 = pneg %p405
      // Predicated region
      $region61: #{tpu_custom_call.1} parent=5 // pred_check
        _
      $region62: #{tpu_custom_call.1} parent=5 // pred_check_branch
        %408 = sbr.rel (%p405) target = $region64
      $region63: #{tpu_custom_call.1} parent=5 // pred_region
        %s409 = ssub.s32 %s22, 1
        // Predicated region
        $region65: #{tpu_custom_call.1} parent=63 // pred_check
          %p410 = pneg %p62
        $region66: #{tpu_custom_call.1} parent=63 // pred_check_branch
          %412 = sbr.rel (%p410) target = $region68
        $region67: #{tpu_custom_call.1} parent=63 // pred_region
          %414 = dma.done [#allocation10], 128
        $region68: #{tpu_custom_call.1} parent=63 // pred_fallthru
          _
        // Predicated region
        $region69: #{tpu_custom_call.1} parent=63 // pred_check
          %p415 = pneg %p136
        $region70: #{tpu_custom_call.1} parent=63 // pred_check_branch
          %417 = sbr.rel (%p415) target = $region72
        $region71: #{tpu_custom_call.1} parent=63 // pred_region
          %419 = dma.done [#allocation12], 16
        $region72: #{tpu_custom_call.1} parent=63 // pred_fallthru
          _
        // Predicated region
        $region73: #{tpu_custom_call.1} parent=63 // pred_check
          %p420 = pneg %p178
        $region74: #{tpu_custom_call.1} parent=63 // pred_check_branch
          %422 = sbr.rel (%p420) target = $region76
        $region75: #{tpu_custom_call.1} parent=63 // pred_region
          %424 = dma.done [#allocation12], 16
        $region76: #{tpu_custom_call.1} parent=63 // pred_fallthru
          _
        // Predicated region
        $region77: #{tpu_custom_call.1} parent=63 // pred_check
          %p425 = pneg %p220
        $region78: #{tpu_custom_call.1} parent=63 // pred_check_branch
          %427 = sbr.rel (%p425) target = $region80
        $region79: #{tpu_custom_call.1} parent=63 // pred_region
          %429 = dma.done [#allocation15], 16
        $region80: #{tpu_custom_call.1} parent=63 // pred_fallthru
          _
        %p430 = pneg %p62
        %p431 = pneg %p59
        %s432 = sld [smem:[#allocation8]]
        %s433 = sadd.s32 %s432, %s32
        %p434 = scmp.lt.s32.totalorder %s433, 2
        %s435 = scalar_select %p434, %s433, 2
        %p436 = scmp.lt.s32.totalorder %s34, 0
        %s437 = scalar_select %p436, %s34, 0
        %s438 = sadd.s32 %s437, %s435
        %s439 = smul.addr %s438, 8
        %s440 = scalar_lea.vmem %s2, %s439
        %p441 = pneg %p94
        %p442 = pneg %p91
        %p443 = pneg %p115
        %p444 = pneg %p112
        %p445 = pneg %p136
        %p446 = pneg %p133
        %p447 = pneg %p157
        %p448 = pneg %p154
        %p449 = pneg %p178
        %p450 = pneg %p175
        %p451 = pneg %p199
        %p452 = pneg %p196
        %p453 = pneg %p220
        %p454 = pneg %p217
        %p455 = pneg %p241
        %p456 = pneg %p238
        %p457 = pneg %p262
        %p458 = pneg %p259
        %p459 = pneg %p283
        %p460 = pneg %p280
        %p461 = pneg %p304
        %p462 = pneg %p301
        %s463 = sld [smem:[#allocation8]]
        %s464 = sadd.s32 %s463, %s32
        %p465 = scmp.lt.s32.totalorder %s464, 2
        %s466 = scalar_select %p465, %s464, 2
        %p467 = scmp.lt.s32.totalorder %s34, 0
        %s468 = scalar_select %p467, %s34, 0
        %s469 = sadd.s32 %s468, %s466
        %s470 = smul.addr %s469, 8
        %s471 = scalar_lea.vmem %s2, %s470
        %s472 = sld [smem:[#allocation8]]
        %s473 = sadd.s32 %s472, %s32
        %p474 = scmp.eq.s32.totalorder %s32, 0
        %p475 = scmp.eq.s32.totalorder %s33, 0
        %p476 = pnand %p474, %p475
        %p477 = pneg %p476
        // Predicated region
        $region81: #{tpu_custom_call.1} parent=63 // pred_check
          _
        $region82: #{tpu_custom_call.1} parent=63 // pred_check_branch
          %479 = sbr.rel (%p476) target = $region84
        $region83: #{tpu_custom_call.1} parent=63 // pred_region
          %v480 = vld [vmem:[#allocation9] sm:$0xff]
          %v481 = vld [vmem:[%s3] sm:$0xff]
          %v482 = vld [vmem:[%s3 + $0x8] sm:$0xff]
          %v483 = vld [vmem:[#allocation11] sm:$0x1]
          %v485 = vperm.slane %v483, 0
          %vm487 = vcmask 130048
          %v489 = vsel %vm487, %v480, 0
          %491 = vmatpush.msra.mxu0 0.0
          %492 = vmatpush.msra.mxu0 0.0
          %493 = vmatpush.msra.mxu0 0.0
          %494 = vmatpush.msra.mxu0 0.0
          %495 = vmatpush.msra.mxu0 0.0
          %496 = vmatpush.msra.mxu0 0.0
          %497 = vmatpush.msra.mxu0 0.0
          %498 = vmatpush.msra.mxu0 0.0
          %499 = vmatpush.msra.mxu0 0.0
          %500 = vmatpush.msra.mxu0 0.0
          %501 = vmatpush.msra.mxu0 0.0
          %502 = vmatpush.msra.mxu0 0.0
          %503 = vmatpush.msra.mxu0 0.0
          %504 = vmatpush.msra.mxu0 0.0
          %505 = vmatpush.msra.mxu0 %v482
          %506 = vmatpush.msra.mxu0 %v481
          %507 = vmatmul.f32.gmra.mxu0 %v489
          %v508 = vpop.f32.mrf.mxu0
          %v509 = vadd.f32 %v485, %v508
          %510 = vdwg.mxu0
          %vm511 = vcmask 261120
          %512 = vst.msk [vmem:[#allocation2] sm:$0xff] %vm511, %v509
          %vm513 = vcmask 7168
          %514 = vst.msk [vmem:[#allocation4] sm:$0xff] %vm513, -inf
          %515 = vst.msk [vmem:[#allocation5] sm:$0xff] %vm513, 0.0
          %516 = vst.msk [vmem:[#allocation6] sm:$0xff] %vm487, 0.0
        $region84: #{tpu_custom_call.1} parent=63 // pred_fallthru
          _
        %v517 = vld [vmem:[%s471] sm:$0xff]
        // Predicated region
        $region85: #{tpu_custom_call.1} parent=63 // pred_check
          %p518 = pneg %p475
        $region86: #{tpu_custom_call.1} parent=63 // pred_check_branch
          %520 = sbr.rel (%p518) target = $region88
        $region87: #{tpu_custom_call.1} parent=63 // pred_region
          %v521 = vld [vmem:[#allocation2] sm:$0xff]
          %vm522 = vcmask 64512
          %v524 = vsel %vm522, %v517, 0
          %526 = vmatpush.msra.mxu0 0.0
          %527 = vmatpush.msra.mxu0 0.0
          %528 = vmatpush.msra.mxu0 0.0
          %529 = vmatpush.msra.mxu0 0.0
          %530 = vmatpush.msra.mxu0 0.0
          %531 = vmatpush.msra.mxu0 0.0
          %532 = vmatpush.msra.mxu0 0.0
          %533 = vmatpush.msra.mxu0 0.0
          %534 = vmatpush.msra.mxu0 0.0
          %535 = vmatpush.msra.mxu0 0.0
          %536 = vmatpush.msra.mxu0 0.0
          %537 = vmatpush.msra.mxu0 0.0
          %538 = vmatpush.msra.mxu0 0.0
          %539 = vmatpush.msra.mxu0 0.0
          %540 = vmatpush.msra.mxu0 0.0
          %541 = vmatpush.msra.mxu0 %v521
          %542 = vmatmul.f32.gmra.mxu0 %v524
          %v543 = vpop.f32.mrf.mxu0
          %v544 = vadd.f32 0.0, %v543
          %545 = vdwg.mxu0
          %v546 = vmax.f32 %v544, 0.0
          %v547 = vld [vmem:[%s5] sm:$0xff]
          %v548 = vld [vmem:[%s5 + $0x8] sm:$0xff]
          %v549 = vld [vmem:[%s5 + $0x10] sm:$0xff]
          %v550 = vld [vmem:[%s5 + $0x18] sm:$0xff]
          %v551 = vld [vmem:[#allocation13] sm:$0x1]
          %v553 = vperm.slane %v551, 0
          %vm555 = vcmask 261120
          %v557 = vsel %vm555, %v546, 0
          %559 = vmatpush.msra.mxu0 0.0
          %560 = vmatpush.msra.mxu0 0.0
          %561 = vmatpush.msra.mxu0 0.0
          %562 = vmatpush.msra.mxu0 0.0
          %563 = vmatpush.msra.mxu0 0.0
          %564 = vmatpush.msra.mxu0 0.0
          %565 = vmatpush.msra.mxu0 0.0
          %566 = vmatpush.msra.mxu0 0.0
          %567 = vmatpush.msra.mxu0 0.0
          %568 = vmatpush.msra.mxu0 0.0
          %569 = vmatpush.msra.mxu0 0.0
          %570 = vmatpush.msra.mxu0 0.0
          %571 = vmatpush.msra.mxu0 %v550
          %572 = vmatpush.msra.mxu0 %v549
          %573 = vmatpush.msra.mxu0 %v548
          %574 = vmatpush.msra.mxu0 %v547
          %575 = vmatmul.f32.gmra.mxu0 %v557
          %v576 = vpop.f32.mrf.mxu0
          %v577 = vadd.f32 %v553, %v576
          %578 = vdwg.mxu0
          %vm579 = vcmask 130048
          %580 = vst.msk [vmem:[#allocation3] sm:$0xff] %vm579, %v577
        $region88: #{tpu_custom_call.1} parent=63 // pred_fallthru
          _
        %p581 = scmp.eq.s32.totalorder %s33, 1
        // Predicated region
        $region89: #{tpu_custom_call.1} parent=63 // pred_check
          %p582 = pneg %p581
        $region90: #{tpu_custom_call.1} parent=63 // pred_check_branch
          %584 = sbr.rel (%p582) target = $region92
        $region91: #{tpu_custom_call.1} parent=63 // pred_region
          %v585 = vld [vmem:[#allocation3] sm:$0xff]
          %vm586 = vcmask 64512
          %v588 = vsel %vm586, %v517, 0
          %590 = vmatpush.msra.mxu0 0.0
          %591 = vmatpush.msra.mxu0 0.0
          %592 = vmatpush.msra.mxu0 0.0
          %593 = vmatpush.msra.mxu0 0.0
          %594 = vmatpush.msra.mxu0 0.0
          %595 = vmatpush.msra.mxu0 0.0
          %596 = vmatpush.msra.mxu0 0.0
          %597 = vmatpush.msra.mxu0 0.0
          %598 = vmatpush.msra.mxu0 0.0
          %599 = vmatpush.msra.mxu0 0.0
          %600 = vmatpush.msra.mxu0 0.0
          %601 = vmatpush.msra.mxu0 0.0
          %602 = vmatpush.msra.mxu0 0.0
          %603 = vmatpush.msra.mxu0 0.0
          %604 = vmatpush.msra.mxu0 0.0
          %605 = vmatpush.msra.mxu0 %v585
          %606 = vmatmul.f32.gmra.mxu0 %v588
          %v607 = vpop.f32.mrf.mxu0
          %v608 = vadd.f32 0.0, %v607
          %609 = vdwg.mxu0
          %v610 = vld [vmem:[%s7] sm:$0xff]
          %v611 = vld [vmem:[%s7 + $0x8] sm:$0xff]
          %v612 = vld [vmem:[#allocation14] sm:$0x1]
          %v614 = vperm.slane %v612, 0
          %vm616 = vcmask 130048
          %v618 = vsel %vm616, %v608, 0
          %620 = vmatpush.msra.mxu0 0.0
          %621 = vmatpush.msra.mxu0 0.0
          %622 = vmatpush.msra.mxu0 0.0
          %623 = vmatpush.msra.mxu0 0.0
          %624 = vmatpush.msra.mxu0 0.0
          %625 = vmatpush.msra.mxu0 0.0
          %626 = vmatpush.msra.mxu0 0.0
          %627 = vmatpush.msra.mxu0 0.0
          %628 = vmatpush.msra.mxu0 0.0
          %629 = vmatpush.msra.mxu0 0.0
          %630 = vmatpush.msra.mxu0 0.0
          %631 = vmatpush.msra.mxu0 0.0
          %632 = vmatpush.msra.mxu0 0.0
          %633 = vmatpush.msra.mxu0 0.0
          %634 = vmatpush.msra.mxu0 %v611
          %635 = vmatpush.msra.mxu0 %v610
          %636 = vmatmul.f32.gmra.mxu0 %v618
          %v637 = vpop.f32.mrf.mxu0
          %v638 = vadd.f32 %v614, %v637
          %639 = vdwg.mxu0
          %v640 = vtanh.pop %v638
          %v641 = vld [vmem:[%s9] sm:$0x1]
          %v643 = vperm.slane %v641, 0
          %v645 = vmul.f32 %v640, %v643
          %v646 = vsel %vm616, %v645, 0.0
          %647 = vadd.xlane.f32.xlu0 %v646
          %v648 = vpop.xlane.xlu0 %647
          %v649 = vld [vmem:[#allocation4] sm:$0xff]
          %v650 = vmax.f32 %v649, %v648
          %v651 = vsub.f32 %v649, %v650
          %v652 = vmul.f32 %v651, 1.442695
          %v653 = vpow.pop %v652
          %v654 = vsub.f32 %v648, %v650
          %v655 = vmul.f32 %v654, 1.442695
          %v656 = vpow.pop %v655
          %v657 = vld [vmem:[#allocation5] sm:$0xff]
          %v658 = vmul.f32 %v653, %v657
          %v659 = vadd.f32 %v658, %v656
          %vm660 = vcmask 7168
          %661 = vst.msk [vmem:[#allocation5] sm:$0xff] %vm660, %v659
          %v662 = vld [vmem:[#allocation6] sm:$0xff]
          %664 = vset.pattern.permute.xlu0 0
          %665 = vperm.xlu0 %664, %v653
          %v666 = vpop.permute.xlu0 %665
          %v668 = vmul.f32 %v666, %v662
          %670 = vset.pattern.permute.xlu0 0
          %671 = vperm.xlu0 %670, %v656
          %v672 = vpop.permute.xlu0 %671
          %v674 = vmul.f32 %v672, %v608
          %v675 = vadd.f32 %v668, %v674
          %676 = vst.msk [vmem:[#allocation6] sm:$0xff] %vm616, %v675
          %677 = vst.msk [vmem:[#allocation4] sm:$0xff] %vm660, %v650
        $region92: #{tpu_custom_call.1} parent=63 // pred_fallthru
          _
        %p678 = scmp.eq.s32.totalorder %s32, 1
        %p679 = pnand %p581, %p678
        %p680 = pneg %p679
        // Predicated region
        $region93: #{tpu_custom_call.1} parent=63 // pred_check
          _
        $region94: #{tpu_custom_call.1} parent=63 // pred_check_branch
          %682 = sbr.rel (%p679) target = $region96
        $region95: #{tpu_custom_call.1} parent=63 // pred_region
          %v683 = vld [vmem:[#allocation6] sm:$0xff]
          %v684 = vld [vmem:[#allocation5] sm:$0xff]
          %v685 = vrcp.pop %v684
          %v686 = vmul.f32 %v684, %v685
          %v687 = vsub.f32 1.0, %v686
          %v688 = vmul.f32 %v685, %v687
          %v689 = vadd.f32 %v685, %v688
          %vm690 = vweird.f32 %v684
          %vm691 = vweird.f32 %v685
          %vm692 = vmor %vm690, %vm691
          %v693 = vsel %vm692, %v685, %v689
          %v694 = vand.u32 2147483647, %v684
          %vm695 = vcmp.eq.f32.partialorder %v694, 8.507059e+37
          %v696 = vand.u32 %v684, 2147483648
          %v697 = vor.u32 1.1754944e-38, %v696
          %v698 = vsel %vm695, %v697, %v693
          %700 = vset.pattern.permute.xlu0 0
          %701 = vperm.xlu0 %700, %v698
          %v702 = vpop.permute.xlu0 %701
          %v704 = vmul.f32 %v683, %v702
          %v705 = vld [vmem:[%s10] sm:$0xff]
          %v706 = vld [vmem:[%s10 + $0x8] sm:$0xff]
          %v707 = vld [vmem:[%s11] sm:$0x1]
          %v709 = vperm.slane %v707, 0
          %vm711 = vcmask 130048
          %v713 = vsel %vm711, %v704, 0
          %715 = vmatpush.msra.mxu0 0.0
          %716 = vmatpush.msra.mxu0 0.0
          %717 = vmatpush.msra.mxu0 0.0
          %718 = vmatpush.msra.mxu0 0.0
          %719 = vmatpush.msra.mxu0 0.0
          %720 = vmatpush.msra.mxu0 0.0
          %721 = vmatpush.msra.mxu0 0.0
          %722 = vmatpush.msra.mxu0 0.0
          %723 = vmatpush.msra.mxu0 0.0
          %724 = vmatpush.msra.mxu0 0.0
          %725 = vmatpush.msra.mxu0 0.0
          %726 = vmatpush.msra.mxu0 0.0
          %727 = vmatpush.msra.mxu0 0.0
          %728 = vmatpush.msra.mxu0 0.0
          %729 = vmatpush.msra.mxu0 %v706
          %730 = vmatpush.msra.mxu0 %v705
          %731 = vmatmul.f32.gmra.mxu0 %v713
          %v732 = vpop.f32.mrf.mxu0
          %v733 = vadd.f32 %v709, %v732
          %734 = vdwg.mxu0
          %vm735 = vcmask 31744
          %v736 = vsel %vm735, %v733, -inf
          %737 = vmax.xlane.f32.xlu0 %v736
          %v738 = vpop.xlane.xlu0 %737
          %v739 = vsub.f32 %v733, %v738
          %v740 = vmul.f32 %v739, 1.442695
          %v741 = vpow.pop %v740
          %v742 = vsel %vm735, %v741, 0.0
          %743 = vadd.xlane.f32.xlu0 %v742
          %v744 = vpop.xlane.xlu0 %743
          %v745 = vlog2.pop %v744
          %v746 = vmul.f32 %v745, 0.6931472
          %v747 = vadd.f32 %v746, %v738
          %v748 = vsub.f32 %v733, %v747
          %749 = vst.msk [vmem:[%s12] sm:$0xff] %vm735, %v748
        $region96: #{tpu_custom_call.1} parent=63 // pred_fallthru
          _
        // Predicated region
        $region97: #{tpu_custom_call.1} parent=63 // pred_check
          %p750 = pneg %p301
        $region98: #{tpu_custom_call.1} parent=63 // pred_check_branch
          %752 = sbr.rel (%p750) target = $region100
        $region99: #{tpu_custom_call.1} parent=63 // pred_region
          _
        $region100: #{tpu_custom_call.1} parent=63 // pred_fallthru
          _
        // Predicated region
        $region101: #{tpu_custom_call.1} parent=63 // pred_check
          %p753 = pneg %p301
        $region102: #{tpu_custom_call.1} parent=63 // pred_check_branch
          %755 = sbr.rel (%p753) target = $region104
        $region103: #{tpu_custom_call.1} parent=63 // pred_region
          _
        $region104: #{tpu_custom_call.1} parent=63 // pred_fallthru
          _
      $region64: #{tpu_custom_call.1} parent=5 // pred_fallthru
        _
      %p756 = scmp.le.s32.totalorder 2, %s22
      // Predicated region
      $region105: #{tpu_custom_call.1} parent=5 // pred_check
        %p757 = pneg %p756
      $region106: #{tpu_custom_call.1} parent=5 // pred_check_branch
        %759 = sbr.rel (%p757) target = $region108
      $region107: #{tpu_custom_call.1} parent=5 // pred_region
        %s760 = ssub.s32 %s22, 2
      $region108: #{tpu_custom_call.1} parent=5 // pred_fallthru
        _
    $region6: #{tpu_custom_call.1} parent=1 // loop_footer
      %s26 = sadd.s32 1, %s22
    $region7: #{tpu_custom_call.1} parent=1 // loop_footer_branch
      %21 = sbr.rel target = $region3
    $region8: #{tpu_custom_call.1} parent=1 // loop_exit
      _
    %761 = vsyncpa [#allocation10], 1
    %s762 = scalar_lea.sflag [#allocation10], 1
    %763 = vsyncpa %s762, 1
    %764 = vsyncpa [#allocation12], 1
    %765 = vsyncpa [#allocation15], 1

</llo_original>
